<compile_context>
chip_gen: v7x
topology: tpu7x:2x2x1
jax: 0.10.0
libtpu: 0.0.40
codegen_flags: <defaults>
</compile_context>

<pallas_src>
import functools

import jax
import jax.numpy as jnp
import numpy as np
from jax.experimental import pallas as pl
from jax.experimental.pallas import tpu as pltpu

EPS = 1e-5


def _halo_rows(W):
    # Halo must cover the largest row shift (W + 1); round up to a sublane
    # multiple so the interior write stays sublane-aligned.
    return ((W + 1 + 7) // 8) * 8


def _use_bf16_taps():
    # v6e / v7x have a native bf16 VPU datapath; v5e (and older) do not, so
    # keep elementwise tap math in f32 there and cast only at the MXU operand.
    try:
        kind = jax.devices()[0].device_kind.lower()
    except Exception:
        return False
    return ("v6" in kind) or ("v7" in kind)


def _build_tap_mask(N, C, H, W, dtype):
    """Static (R, 9C) 0/1 border mask matching the kernel's tap concat order."""
    R = N * H * W
    r = np.arange(R)
    hh = (r // W) % H
    ww = r % W
    cols = []
    for kh in range(3):
        for kw in range(3):
            dh, dw = kh - 1, kw - 1
            m = ((hh + dh >= 0) & (hh + dh < H) &
                 (ww + dw >= 0) & (ww + dw < W)).astype(np.float32)
            cols.append(np.repeat(m[:, None], C, axis=1))
    return jnp.asarray(np.concatenate(cols, axis=1), dtype=dtype)


def _make_tower_kernel(N, C, H, W, tap_dtype, eps=EPS):
    R = N * H * W                 # rows of the flattened (R, C) activation
    PAD = _halo_rows(W)
    inv_r = 1.0 / R

    def kernel(x_ref, w_ref, bn_ref, mask_ref, o_ref, buf_ref):
        blk = pl.program_id(0)    # ResBlock index (weights streamed per step)

        @pl.when(blk == 0)
        def _():
            # Zero only the halo rows once; the interior is overwritten before
            # every conv and the halo stays zero for all blocks.
            buf_ref[0:PAD, :] = jnp.zeros((PAD, C), jnp.float32)
            buf_ref[PAD + R:PAD + R + PAD, :] = jnp.zeros((PAD, C), jnp.float32)
            # o_ref doubles as the VMEM-resident activation across blocks; it
            # is DMA'd to HBM only once, after the final grid step.
            o_ref[...] = x_ref[...]

        x = o_ref[...]                     # (R, C) f32 activation entering blk
        tap_mask = mask_ref[...]           # (R, 9C) 0/1 border mask, tap_dtype
        bn = bn_ref[0]                     # (4, C) f32: g1, b1, g2, b2

        def conv3x3(w_bf16):
            # im2col: nine sublane-shifted slices of the haloed scratch, cast
            # to tap_dtype at load, packed into ONE (R, 9C) tap matrix, border
            # masked with a single multiply, and contracted on the MXU as a
            # single K = 9C matmul with f32 accumulation.
            blocks = []
            for kh in range(3):
                for kw in range(3):
                    off = (kh - 1) * W + (kw - 1)
                    blocks.append(
                        buf_ref[PAD + off:PAD + off + R, :].astype(tap_dtype))
            taps = jnp.concatenate(blocks, axis=1) * tap_mask
            return jnp.dot(taps.astype(jnp.bfloat16), w_bf16,
                           preferred_element_type=jnp.float32)

        def batchnorm(y, gamma, beta):
            # Training-mode BN with mean-centred variance (no E[y^2]-E[y]^2
            # cancellation), fused per-channel scale/shift.
            mean = jnp.sum(y, axis=0, keepdims=True) * inv_r
            centered = y - mean
            var = jnp.sum(centered * centered, axis=0, keepdims=True) * inv_r
            scale = gamma * jax.lax.rsqrt(var + eps)       # (1, C)
            return centered * scale + beta

        # conv1 -> bn1 -> relu
        buf_ref[PAD:PAD + R, :] = x
        h1 = jnp.maximum(
            batchnorm(conv3x3(w_ref[0]), bn[0:1, :], bn[1:2, :]), 0.0)

        # conv2 -> bn2
        buf_ref[PAD:PAD + R, :] = h1
        h2 = batchnorm(conv3x3(w_ref[1]), bn[2:3, :], bn[3:4, :])

        # residual add + relu; stays VMEM-resident for the next block.
        o_ref[...] = jnp.maximum(h2 + x, 0.0)

    return kernel


def _tower_pallas(x_rc, w_all, bn_all, mask, *, N, C, H, W):
    """Fused tower of ResBlocks on a flattened-NHWC (R, C) f32 activation."""
    R = N * H * W
    B = w_all.shape[0] // 2            # number of fused ResBlocks
    PAD = _halo_rows(W)
    tap_dtype = mask.dtype

    kernel = _make_tower_kernel(N, C, H, W, tap_dtype)

    flops = B * 2 * 2 * R * (9 * C) * C
    bytes_accessed = (2 * R * C * 4                       # x in + out
                      + w_all.size * 2                    # bf16 weights
                      + bn_all.size * 4                   # f32 BN params
                      + mask.size * np.dtype(mask.dtype).itemsize)

    return pl.pallas_call(
        kernel,
        out_shape=jax.ShapeDtypeStruct((R, C), jnp.float32),
        grid=(B,),
        in_specs=[
            # Activation: fetched once (constant block index across the grid).
            pl.BlockSpec((R, C), lambda b: (0, 0)),
            # Per-block weight pack, streamed/prefetched while block b-1 runs.
            pl.BlockSpec((2, 9 * C, C), lambda b: (b, 0, 0)),
            # Per-block BN affine params.
            pl.BlockSpec((1, 4, C), lambda b: (b, 0, 0)),
            # Static tap border mask: fetched once.
            pl.BlockSpec((R, 9 * C), lambda b: (0, 0)),
        ],
        out_specs=pl.BlockSpec((R, C), lambda b: (0, 0)),
        scratch_shapes=[pltpu.VMEM((R + 2 * PAD, C), jnp.float32)],
        input_output_aliases={0: 0},
        compiler_params=pltpu.CompilerParams(
            dimension_semantics=("arbitrary",)),
        cost_estimate=pl.CostEstimate(
            flops=flops, transcendentals=2 * B * C,
            bytes_accessed=bytes_accessed),
    )(x_rc, w_all, bn_all, mask)


def _pack_params(params_list, C):
    def im2col_weight(w):
        # PyTorch (C_out, C_in, kh, kw) -> (kh, kw, C_in, C_out) -> (9*C_in, C_out)
        return jnp.transpose(w, (2, 3, 1, 0)).reshape(9 * C, C)

    w_all = jnp.concatenate(
        [jnp.stack([im2col_weight(p["conv1_w"]), im2col_weight(p["conv2_w"])])
         for p in params_list], axis=0).astype(jnp.bfloat16)        # (2B, 9C, C)
    bn_all = jnp.stack(
        [jnp.stack([p["bn1_gamma"], p["bn1_beta"],
                    p["bn2_gamma"], p["bn2_beta"]])
         for p in params_list], axis=0).astype(jnp.float32)         # (B, 4, C)
    return w_all, bn_all


def resblock_tower_forward_rc(x_rc, params_list, *, N, H, W):
    """Fused ResBlock tower on flattened-NHWC (R, C) activations (no NCHW relayout)."""
    R, C = x_rc.shape
    assert R == N * H * W
    tap_dtype = jnp.bfloat16 if _use_bf16_taps() else jnp.float32
    w_all, bn_all = _pack_params(params_list, C)
    mask = _build_tap_mask(N, C, H, W, tap_dtype)
    fn = jax.jit(functools.partial(_tower_pallas, N=N, C=C, H=H, W=W))
    return fn(x_rc.astype(jnp.float32), w_all, bn_all, mask)


def resblock_tower_forward(x_nchw, params_list):
    """Fused tower with NCHW in/out (keeps two relayouts for compatibility)."""
    N, C, H, W = x_nchw.shape
    tap_dtype = jnp.bfloat16 if _use_bf16_taps() else jnp.float32
    w_all, bn_all = _pack_params(params_list, C)
    mask = _build_tap_mask(N, C, H, W, tap_dtype)

    def fwd(x_nchw, w_all, bn_all, mask):
        # NCHW -> NHWC -> (R, C): sublane-dense rows, channels on lanes.
        x_rc = jnp.transpose(x_nchw, (0, 2, 3, 1)).reshape(N * H * W, C)
        out_rc = _tower_pallas(x_rc.astype(jnp.float32), w_all, bn_all, mask,
                               N=N, C=C, H=H, W=W)
        out = jnp.transpose(out_rc.reshape(N, H, W, C), (0, 3, 1, 2))
        return out.astype(x_nchw.dtype)

    return jax.jit(fwd)(x_nchw, w_all, bn_all, mask)


def resblock_forward(x_nchw, params):
    """Single ResBlock, NCHW in/out — drop-in for the PyTorch module's forward."""
    return resblock_tower_forward(x_nchw, [params])


def resblock_reference(x, params, eps=EPS):
    """Pure-JAX reference mirroring the PyTorch forward (training-mode BN)."""
    def conv(h, w, b):
        y = jax.lax.conv_general_dilated(
            h, w, window_strides=(1, 1), padding=((1, 1), (1, 1)),
            dimension_numbers=("NCHW", "OIHW", "NCHW"))
        return y + b[None, :, None, None]

    def bn(y, g, bta):
        mean = y.mean(axis=(0, 2, 3), keepdims=True)
        var = ((y - mean) ** 2).mean(axis=(0, 2, 3), keepdims=True)
        return (y - mean) * jax.lax.rsqrt(var + eps) * g[None, :, None, None] \
            + bta[None, :, None, None]

    h = jax.nn.relu(bn(conv(x, params["conv1_w"], params["conv1_b"]),
                       params["bn1_gamma"], params["bn1_beta"]))
    h = bn(conv(h, params["conv2_w"], params["conv2_b"]),
           params["bn2_gamma"], params["bn2_beta"])
    return jax.nn.relu(h + x)


if __name__ == "__main__":
    key = jax.random.PRNGKey(0)
    N, C, H, W = 2, 32, 8, 8  # batch=2, num_hidden=32, chess board 8x8
    keys = jax.random.split(key, 1 + 8 * 3)

    x = jax.random.normal(keys[0], (N, C, H, W), jnp.float32)

    def make_params(ks):
        return {
            "conv1_w": 0.1 * jax.random.normal(ks[0], (C, C, 3, 3), jnp.float32),
            "conv1_b": 0.1 * jax.random.normal(ks[1], (C,), jnp.float32),
            "bn1_gamma": 1.0 + 0.1 * jax.random.normal(ks[2], (C,), jnp.float32),
            "bn1_beta": 0.1 * jax.random.normal(ks[3], (C,), jnp.float32),
            "conv2_w": 0.1 * jax.random.normal(ks[4], (C, C, 3, 3), jnp.float32),
            "conv2_b": 0.1 * jax.random.normal(ks[5], (C,), jnp.float32),
            "bn2_gamma": 1.0 + 0.1 * jax.random.normal(ks[6], (C,), jnp.float32),
            "bn2_beta": 0.1 * jax.random.normal(ks[7], (C,), jnp.float32),
        }

    params_list = [make_params(keys[1 + 8 * i:1 + 8 * (i + 1)]) for i in range(3)]

    # 1) Single ResBlock — exactly the PyTorch module's forward (NCHW API).
    out = resblock_forward(x, params_list[0])
    jax.block_until_ready(out)
    ref = resblock_reference(x, params_list[0])
    # Tolerance reflects bf16 MXU operands (f32 accumulation) over two stacked
    # convolutions; f32 reference.
    np.testing.assert_allclose(np.asarray(out), np.asarray(ref),
                               rtol=2e-2, atol=2e-2)

    # 2) Three stacked ResBlocks fused into ONE pallas_call via the grid axis
    #    (VMEM-resident activation, per-block streamed weights), using the
    #    transpose-free (R, C) entry point.
    x_rc = jnp.transpose(x, (0, 2, 3, 1)).reshape(N * H * W, C)
    out_rc = resblock_tower_forward_rc(x_rc, params_list, N=N, H=H, W=W)
    jax.block_until_ready(out_rc)
    ref3 = x
    for p in params_list:
        ref3 = resblock_reference(ref3, p)
    ref3_rc = jnp.transpose(ref3, (0, 2, 3, 1)).reshape(N * H * W, C)
    np.testing.assert_allclose(np.asarray(out_rc), np.asarray(ref3_rc),
                               rtol=5e-2, atol=5e-2)

    print("KERNEL_OK")
</pallas_src>

<mosaic_0001>
module attributes {stable_mosaic.version = 11 : i64} {
  func.func @kernel(%arg0: i32, %arg1: memref<128x32xf32, #tpu.memory_space<vmem>>, %arg2: memref<2x288x32xbf16, #tpu.memory_space<vmem>>, %arg3: memref<1x4x32xf32, #tpu.memory_space<vmem>>, %arg4: memref<128x288xf32, #tpu.memory_space<vmem>>, %arg5: memref<128x32xf32, #tpu.memory_space<vmem>>, %arg6: memref<160x32xf32, #tpu.memory_space<vmem>>) attributes {dimension_semantics = [#tpu.dimension_semantics<arbitrary>], iteration_bounds = array<i64: 1>, scalar_prefetch = 0 : i64, scratch_operands = 1 : i64, tpu.core_type = #tpu.core_type<tc>, window_params = [{pipeline_mode = #tpu.pipeline_mode<synchronous>, transform_indices = @transform_0, window_bounds = array<i64: 128, 32>}, {transform_indices = @transform_1, window_bounds = array<i64: 2, 288, 32>}, {transform_indices = @transform_2, window_bounds = array<i64: 1, 4, 32>}, {pipeline_mode = #tpu.pipeline_mode<synchronous>, transform_indices = @transform_3, window_bounds = array<i64: 128, 288>}, {pipeline_mode = #tpu.pipeline_mode<synchronous>, transform_indices = @transform_4, window_bounds = array<i64: 128, 32>}]} {
    %c0_i32 = arith.constant 0 : i32
    %0 = arith.cmpi eq, %arg0, %c0_i32 : i32
    %1 = arith.extui %0 : i1 to i32
    %c0_i32_0 = arith.constant 0 : i32
    %2 = arith.cmpi ne, %1, %c0_i32_0 : i32
    scf.if %2 {
      %cst_58 = arith.constant 0.000000e+00 : f32
      %87 = vector.broadcast %cst_58 : f32 to vector<16x32xf32>
      %c0_59 = arith.constant 0 : index
      %c0_60 = arith.constant 0 : index
      %88 = vector.load %arg6[%c0_59, %c0_60] : memref<160x32xf32, #tpu.memory_space<vmem>>, vector<16x32xf32>
      tpu.vector_store %arg6[%c0_59, %c0_60], %87 {strides = array<i32>} : memref<160x32xf32, #tpu.memory_space<vmem>>, vector<16x32xf32>,
      %cst_61 = arith.constant 0.000000e+00 : f32
      %89 = vector.broadcast %cst_61 : f32 to vector<16x32xf32>
      %c144 = arith.constant 144 : index
      %c0_62 = arith.constant 0 : index
      %90 = vector.load %arg6[%c144, %c0_62] : memref<160x32xf32, #tpu.memory_space<vmem>>, vector<16x32xf32>
      tpu.vector_store %arg6[%c144, %c0_62], %89 {strides = array<i32>} : memref<160x32xf32, #tpu.memory_space<vmem>>, vector<16x32xf32>,
      %c0_63 = arith.constant 0 : index
      %c0_64 = arith.constant 0 : index
      %91 = vector.load %arg1[%c0_63, %c0_64] : memref<128x32xf32, #tpu.memory_space<vmem>>, vector<128x32xf32>
      %c0_65 = arith.constant 0 : index
      %c0_66 = arith.constant 0 : index
      %92 = vector.load %arg5[%c0_65, %c0_66] : memref<128x32xf32, #tpu.memory_space<vmem>>, vector<128x32xf32>
      tpu.vector_store %arg5[%c0_65, %c0_66], %91 {strides = array<i32>} : memref<128x32xf32, #tpu.memory_space<vmem>>, vector<128x32xf32>,
    } else {
    }
    %c0 = arith.constant 0 : index
    %c0_1 = arith.constant 0 : index
    %3 = vector.load %arg5[%c0, %c0_1] : memref<128x32xf32, #tpu.memory_space<vmem>>, vector<128x32xf32>
    %c0_2 = arith.constant 0 : index
    %c0_3 = arith.constant 0 : index
    %4 = vector.load %arg4[%c0_2, %c0_3] : memref<128x288xf32, #tpu.memory_space<vmem>>, vector<128x288xf32>
    %c0_4 = arith.constant 0 : index
    %c0_5 = arith.constant 0 : index
    %c0_6 = arith.constant 0 : index
    %5 = vector.load %arg3[%c0_4, %c0_5, %c0_6] : memref<1x4x32xf32, #tpu.memory_space<vmem>>, vector<1x4x32xf32>
    %6 = vector.shape_cast %5 : vector<1x4x32xf32> to vector<4x32xf32>
    %c16 = arith.constant 16 : index
    %c0_7 = arith.constant 0 : index
    %7 = vector.load %arg6[%c16, %c0_7] : memref<160x32xf32, #tpu.memory_space<vmem>>, vector<128x32xf32>
    tpu.vector_store %arg6[%c16, %c0_7], %3 {strides = array<i32>} : memref<160x32xf32, #tpu.memory_space<vmem>>, vector<128x32xf32>,
    %c0_8 = arith.constant 0 : index
    %c0_9 = arith.constant 0 : index
    %c0_10 = arith.constant 0 : index
    %8 = vector.load %arg2[%c0_8, %c0_9, %c0_10] : memref<2x288x32xbf16, #tpu.memory_space<vmem>>, vector<1x288x32xbf16>
    %9 = vector.shape_cast %8 : vector<1x288x32xbf16> to vector<288x32xbf16>
    %c7 = arith.constant 7 : index
    %c0_11 = arith.constant 0 : index
    %10 = vector.load %arg6[%c7, %c0_11] : memref<160x32xf32, #tpu.memory_space<vmem>>, vector<128x32xf32>
    %c8 = arith.constant 8 : index
    %c0_12 = arith.constant 0 : index
    %11 = vector.load %arg6[%c8, %c0_12] : memref<160x32xf32, #tpu.memory_space<vmem>>, vector<128x32xf32>
    %c9 = arith.constant 9 : index
    %c0_13 = arith.constant 0 : index
    %12 = vector.load %arg6[%c9, %c0_13] : memref<160x32xf32, #tpu.memory_space<vmem>>, vector<128x32xf32>
    %c15 = arith.constant 15 : index
    %c0_14 = arith.constant 0 : index
    %13 = vector.load %arg6[%c15, %c0_14] : memref<160x32xf32, #tpu.memory_space<vmem>>, vector<128x32xf32>
    %c16_15 = arith.constant 16 : index
    %c0_16 = arith.constant 0 : index
    %14 = vector.load %arg6[%c16_15, %c0_16] : memref<160x32xf32, #tpu.memory_space<vmem>>, vector<128x32xf32>
    %c17 = arith.constant 17 : index
    %c0_17 = arith.constant 0 : index
    %15 = vector.load %arg6[%c17, %c0_17] : memref<160x32xf32, #tpu.memory_space<vmem>>, vector<128x32xf32>
    %c23 = arith.constant 23 : index
    %c0_18 = arith.constant 0 : index
    %16 = vector.load %arg6[%c23, %c0_18] : memref<160x32xf32, #tpu.memory_space<vmem>>, vector<128x32xf32>
    %c24 = arith.constant 24 : index
    %c0_19 = arith.constant 0 : index
    %17 = vector.load %arg6[%c24, %c0_19] : memref<160x32xf32, #tpu.memory_space<vmem>>, vector<128x32xf32>
    %c25 = arith.constant 25 : index
    %c0_20 = arith.constant 0 : index
    %18 = vector.load %arg6[%c25, %c0_20] : memref<160x32xf32, #tpu.memory_space<vmem>>, vector<128x32xf32>
    %19 = tpu.concatenate %10, %11, %12, %13, %14, %15, %16, %17, %18 in 1 : vector<128x32xf32>, vector<128x32xf32>, vector<128x32xf32>, vector<128x32xf32>, vector<128x32xf32>, vector<128x32xf32>, vector<128x32xf32>, vector<128x32xf32>, vector<128x32xf32> -> vector<128x288xf32>
    %20 = arith.mulf %19, %4 : vector<128x288xf32>
    %21 = arith.truncf %20 : vector<128x288xf32> to vector<128x288xbf16>
    %cst = arith.constant dense<0.000000e+00> : vector<128x32xf32>
    %22 = tpu.matmul %21, %9, %cst {dimension_numbers = #tpu.dot_dimension_numbers<[1], [0], [0], [1], [0, 0, 1, 1], [], []>} : vector<128x288xbf16>, vector<288x32xbf16>, vector<128x32xf32> -> vector<128x32xf32>
    %23 = vector.extract_strided_slice %6 {offsets = [0, 0], sizes = [1, 32], strides = [1, 1]} : vector<4x32xf32> to vector<1x32xf32>
    %24 = vector.extract_strided_slice %6 {offsets = [1, 0], sizes = [1, 32], strides = [1, 1]} : vector<4x32xf32> to vector<1x32xf32>
    %cst_21 = arith.constant dense<0.000000e+00> : vector<32xf32>
    %25 = vector.multi_reduction <add>, %22, %cst_21 [0] : vector<128x32xf32> to vector<32xf32>
    %26 = vector.shape_cast %25 : vector<32xf32> to vector<1x32xf32>
    %cst_22 = arith.constant 7.812500e-03 : f32
    %27 = vector.broadcast %cst_22 : f32 to vector<1x32xf32>
    %28 = arith.mulf %26, %27 : vector<1x32xf32>
    %29 = vector.broadcast %28 : vector<1x32xf32> to vector<128x32xf32>
    %30 = arith.subf %22, %29 : vector<128x32xf32>
    %31 = arith.mulf %30, %30 : vector<128x32xf32>
    %cst_23 = arith.constant dense<0.000000e+00> : vector<32xf32>
    %32 = vector.multi_reduction <add>, %31, %cst_23 [0] : vector<128x32xf32> to vector<32xf32>
    %33 = vector.shape_cast %32 : vector<32xf32> to vector<1x32xf32>
    %cst_24 = arith.constant 7.812500e-03 : f32
    %34 = vector.broadcast %cst_24 : f32 to vector<1x32xf32>
    %35 = arith.mulf %33, %34 : vector<1x32xf32>
    %cst_25 = arith.constant 9.99999974E-6 : f32
    %36 = vector.broadcast %cst_25 : f32 to vector<1x32xf32>
    %37 = arith.addf %35, %36 : vector<1x32xf32>
    %38 = math.rsqrt %37 : vector<1x32xf32>
    %39 = arith.mulf %23, %38 : vector<1x32xf32>
    %40 = vector.broadcast %39 : vector<1x32xf32> to vector<128x32xf32>
    %41 = arith.mulf %30, %40 : vector<128x32xf32>
    %42 = vector.broadcast %24 : vector<1x32xf32> to vector<128x32xf32>
    %43 = arith.addf %41, %42 : vector<128x32xf32>
    %cst_26 = arith.constant 0.000000e+00 : f32
    %44 = vector.broadcast %cst_26 : f32 to vector<128x32xf32>
    %45 = arith.maximumf %43, %44 : vector<128x32xf32>
    %c16_27 = arith.constant 16 : index
    %c0_28 = arith.constant 0 : index
    %46 = vector.load %arg6[%c16_27, %c0_28] : memref<160x32xf32, #tpu.memory_space<vmem>>, vector<128x32xf32>
    tpu.vector_store %arg6[%c16_27, %c0_28], %45 {strides = array<i32>} : memref<160x32xf32, #tpu.memory_space<vmem>>, vector<128x32xf32>,
    %c1 = arith.constant 1 : index
    %c0_29 = arith.constant 0 : index
    %c0_30 = arith.constant 0 : index
    %47 = vector.load %arg2[%c1, %c0_29, %c0_30] : memref<2x288x32xbf16, #tpu.memory_space<vmem>>, vector<1x288x32xbf16>
    %48 = vector.shape_cast %47 : vector<1x288x32xbf16> to vector<288x32xbf16>
    %c7_31 = arith.constant 7 : index
    %c0_32 = arith.constant 0 : index
    %49 = vector.load %arg6[%c7_31, %c0_32] : memref<160x32xf32, #tpu.memory_space<vmem>>, vector<128x32xf32>
    %c8_33 = arith.constant 8 : index
    %c0_34 = arith.constant 0 : index
    %50 = vector.load %arg6[%c8_33, %c0_34] : memref<160x32xf32, #tpu.memory_space<vmem>>, vector<128x32xf32>
    %c9_35 = arith.constant 9 : index
    %c0_36 = arith.constant 0 : index
    %51 = vector.load %arg6[%c9_35, %c0_36] : memref<160x32xf32, #tpu.memory_space<vmem>>, vector<128x32xf32>
    %c15_37 = arith.constant 15 : index
    %c0_38 = arith.constant 0 : index
    %52 = vector.load %arg6[%c15_37, %c0_38] : memref<160x32xf32, #tpu.memory_space<vmem>>, vector<128x32xf32>
    %c16_39 = arith.constant 16 : index
    %c0_40 = arith.constant 0 : index
    %53 = vector.load %arg6[%c16_39, %c0_40] : memref<160x32xf32, #tpu.memory_space<vmem>>, vector<128x32xf32>
    %c17_41 = arith.constant 17 : index
    %c0_42 = arith.constant 0 : index
    %54 = vector.load %arg6[%c17_41, %c0_42] : memref<160x32xf32, #tpu.memory_space<vmem>>, vector<128x32xf32>
    %c23_43 = arith.constant 23 : index
    %c0_44 = arith.constant 0 : index
    %55 = vector.load %arg6[%c23_43, %c0_44] : memref<160x32xf32, #tpu.memory_space<vmem>>, vector<128x32xf32>
    %c24_45 = arith.constant 24 : index
    %c0_46 = arith.constant 0 : index
    %56 = vector.load %arg6[%c24_45, %c0_46] : memref<160x32xf32, #tpu.memory_space<vmem>>, vector<128x32xf32>
    %c25_47 = arith.constant 25 : index
    %c0_48 = arith.constant 0 : index
    %57 = vector.load %arg6[%c25_47, %c0_48] : memref<160x32xf32, #tpu.memory_space<vmem>>, vector<128x32xf32>
    %58 = tpu.concatenate %49, %50, %51, %52, %53, %54, %55, %56, %57 in 1 : vector<128x32xf32>, vector<128x32xf32>, vector<128x32xf32>, vector<128x32xf32>, vector<128x32xf32>, vector<128x32xf32>, vector<128x32xf32>, vector<128x32xf32>, vector<128x32xf32> -> vector<128x288xf32>
    %59 = arith.mulf %58, %4 : vector<128x288xf32>
    %60 = arith.truncf %59 : vector<128x288xf32> to vector<128x288xbf16>
    %cst_49 = arith.constant dense<0.000000e+00> : vector<128x32xf32>
    %61 = tpu.matmul %60, %48, %cst_49 {dimension_numbers = #tpu.dot_dimension_numbers<[1], [0], [0], [1], [0, 0, 1, 1], [], []>} : vector<128x288xbf16>, vector<288x32xbf16>, vector<128x32xf32> -> vector<128x32xf32>
    %62 = vector.extract_strided_slice %6 {offsets = [2, 0], sizes = [1, 32], strides = [1, 1]} : vector<4x32xf32> to vector<1x32xf32>
    %63 = vector.extract_strided_slice %6 {offsets = [3, 0], sizes = [1, 32], strides = [1, 1]} : vector<4x32xf32> to vector<1x32xf32>
    %cst_50 = arith.constant dense<0.000000e+00> : vector<32xf32>
    %64 = vector.multi_reduction <add>, %61, %cst_50 [0] : vector<128x32xf32> to vector<32xf32>
    %65 = vector.shape_cast %64 : vector<32xf32> to vector<1x32xf32>
    %cst_51 = arith.constant 7.812500e-03 : f32
    %66 = vector.broadcast %cst_51 : f32 to vector<1x32xf32>
    %67 = arith.mulf %65, %66 : vector<1x32xf32>
    %68 = vector.broadcast %67 : vector<1x32xf32> to vector<128x32xf32>
    %69 = arith.subf %61, %68 : vector<128x32xf32>
    %70 = arith.mulf %69, %69 : vector<128x32xf32>
    %cst_52 = arith.constant dense<0.000000e+00> : vector<32xf32>
    %71 = vector.multi_reduction <add>, %70, %cst_52 [0] : vector<128x32xf32> to vector<32xf32>
    %72 = vector.shape_cast %71 : vector<32xf32> to vector<1x32xf32>
    %cst_53 = arith.constant 7.812500e-03 : f32
    %73 = vector.broadcast %cst_53 : f32 to vector<1x32xf32>
    %74 = arith.mulf %72, %73 : vector<1x32xf32>
    %cst_54 = arith.constant 9.99999974E-6 : f32
    %75 = vector.broadcast %cst_54 : f32 to vector<1x32xf32>
    %76 = arith.addf %74, %75 : vector<1x32xf32>
    %77 = math.rsqrt %76 : vector<1x32xf32>
    %78 = arith.mulf %62, %77 : vector<1x32xf32>
    %79 = vector.broadcast %78 : vector<1x32xf32> to vector<128x32xf32>
    %80 = arith.mulf %69, %79 : vector<128x32xf32>
    %81 = vector.broadcast %63 : vector<1x32xf32> to vector<128x32xf32>
    %82 = arith.addf %80, %81 : vector<128x32xf32>
    %83 = arith.addf %82, %3 : vector<128x32xf32>
    %cst_55 = arith.constant 0.000000e+00 : f32
    %84 = vector.broadcast %cst_55 : f32 to vector<128x32xf32>
    %85 = arith.maximumf %83, %84 : vector<128x32xf32>
    %c0_56 = arith.constant 0 : index
    %c0_57 = arith.constant 0 : index
    %86 = vector.load %arg5[%c0_56, %c0_57] : memref<128x32xf32, #tpu.memory_space<vmem>>, vector<128x32xf32>
    tpu.vector_store %arg5[%c0_56, %c0_57], %85 {strides = array<i32>} : memref<128x32xf32, #tpu.memory_space<vmem>>, vector<128x32xf32>,
    return
  }
  func.func @transform_0(%arg0: i32) -> (i32, i32) {
    %c0_i32 = arith.constant 0 : i32
    %c0_i32_0 = arith.constant 0 : i32
    %c0_i32_1 = arith.constant 0 : i32
    return %c0_i32, %c0_i32_0 : i32, i32
  }
  func.func @transform_1(%arg0: i32) -> (i32, i32, i32) {
    %c0_i32 = arith.constant 0 : i32
    %c0_i32_0 = arith.constant 0 : i32
    %c0_i32_1 = arith.constant 0 : i32
    return %arg0, %c0_i32, %c0_i32_0 : i32, i32, i32
  }
  func.func @transform_2(%arg0: i32) -> (i32, i32, i32) {
    %c0_i32 = arith.constant 0 : i32
    %c0_i32_0 = arith.constant 0 : i32
    %c0_i32_1 = arith.constant 0 : i32
    return %arg0, %c0_i32, %c0_i32_0 : i32, i32, i32
  }
  func.func @transform_3(%arg0: i32) -> (i32, i32) {
    %c0_i32 = arith.constant 0 : i32
    %c0_i32_0 = arith.constant 0 : i32
    %c0_i32_1 = arith.constant 0 : i32
    return %c0_i32, %c0_i32_0 : i32, i32
  }
  func.func @transform_4(%arg0: i32) -> (i32, i32) {
    %c0_i32 = arith.constant 0 : i32
    %c0_i32_0 = arith.constant 0 : i32
    %c0_i32_1 = arith.constant 0 : i32
    return %c0_i32, %c0_i32_0 : i32, i32
  }
}

</mosaic_0001>

<llo_original>
// kernel: fwd.1
$region0: #{fwd.1}
  #allocation0 [shape = 'u32[]', space=smem, size = 0x4, offset = 0x4, fixed_abs, tag = 'smem constant byte address 0x4 - core index']
  #allocation1 [shape = 'u32[144,128]{1,0:T(1,128)}', space=vmem, size = 0x12000, scoped, tag = 'internal scratch']
  #allocation2 [shape = 'f32[160,32]{1,0:T(8,128)}', space=vmem, size = 0x14000, scoped, tag = 'scratch operand']
  %s0 = inlined_call_operand.vmem [shape: f32[128,32], index: 0, kind: input, shape index: {}, may-alias: {0,4}]
  %s1 = inlined_call_operand.vmem [shape: bf16[2,288,32], index: 1, kind: input, shape index: {}]
  %s2 = inlined_call_operand.vmem [shape: f32[1,4,32], index: 2, kind: input, shape index: {}]
  %s3 = inlined_call_operand.vmem [shape: f32[128,288], index: 3, kind: input, shape index: {}]
  %s4 = inlined_call_operand.vmem [shape: f32[128,32], index: 4, kind: output, shape index: {}, may-alias: {0,4}]
  %s5 = sld [smem:[#allocation0]]
  $region30: #{fwd.1} parent=0
    _
  %s7 = ssub.s32 1, %s5
  %s8 = scalar_select 0, %s7, %s5
  // Predicated region
  $region2: #{fwd.1} parent=0 // pred_check
    _
  $region3: #{fwd.1} parent=0 // pred_check_branch
    %10 = sbr.rel (0) target = $region5
  $region4: #{fwd.1} parent=0 // pred_region
    _
  $region5: #{fwd.1} parent=0 // pred_fallthru
    _
  // Predicated region
  $region6: #{fwd.1} parent=0 // pred_check
    _
  $region7: #{fwd.1} parent=0 // pred_check_branch
    %12 = sbr.rel (0) target = $region9
  $region8: #{fwd.1} parent=0 // pred_region
    _
  $region9: #{fwd.1} parent=0 // pred_fallthru
    _
  // Predicated region
  $region10: #{fwd.1} parent=0 // pred_check
    _
  $region11: #{fwd.1} parent=0 // pred_check_branch
    %14 = sbr.rel (0) target = $region13
  $region12: #{fwd.1} parent=0 // pred_region
    _
  $region13: #{fwd.1} parent=0 // pred_fallthru
    _
  // Predicated region
  $region14: #{fwd.1} parent=0 // pred_check
    _
  $region15: #{fwd.1} parent=0 // pred_check_branch
    %16 = sbr.rel (0) target = $region17
  $region16: #{fwd.1} parent=0 // pred_region
    _
  $region17: #{fwd.1} parent=0 // pred_fallthru
    _
  %p18 = scmp.eq.s32.totalorder 0, 0
  // Predicated region
  $region18: #{fwd.1} parent=0 // pred_check
    %p19 = pneg %p18
  $region19: #{fwd.1} parent=0 // pred_check_branch
    %21 = sbr.rel (%p19) target = $region21
  $region20: #{fwd.1} parent=0 // pred_region
    %vm22 = vcmask 261120
    %23 = vst.msk [vmem:[#allocation2] sm:$0xff] %vm22, 0.0
    %24 = vst.msk [vmem:[#allocation2 + $0x8] sm:$0xff] %vm22, 0.0
    %25 = vst.msk [vmem:[#allocation2 + $0x90] sm:$0xff] %vm22, 0.0
    %26 = vst.msk [vmem:[#allocation2 + $0x98] sm:$0xff] %vm22, 0.0
    %v27 = vld [vmem:[%s0] sm:$0xff]
    %v28 = vld [vmem:[%s0 + $0x8] sm:$0xff]
    %v29 = vld [vmem:[%s0 + $0x10] sm:$0xff]
    %v30 = vld [vmem:[%s0 + $0x18] sm:$0xff]
    %v31 = vld [vmem:[%s0 + $0x20] sm:$0xff]
    %v32 = vld [vmem:[%s0 + $0x28] sm:$0xff]
    %v33 = vld [vmem:[%s0 + $0x30] sm:$0xff]
    %v34 = vld [vmem:[%s0 + $0x38] sm:$0xff]
    %v35 = vld [vmem:[%s0 + $0x40] sm:$0xff]
    %v36 = vld [vmem:[%s0 + $0x48] sm:$0xff]
    %v37 = vld [vmem:[%s0 + $0x50] sm:$0xff]
    %v38 = vld [vmem:[%s0 + $0x58] sm:$0xff]
    %v39 = vld [vmem:[%s0 + $0x60] sm:$0xff]
    %v40 = vld [vmem:[%s0 + $0x68] sm:$0xff]
    %v41 = vld [vmem:[%s0 + $0x70] sm:$0xff]
    %v42 = vld [vmem:[%s0 + $0x78] sm:$0xff]
    %43 = vst.msk [vmem:[%s4] sm:$0xff] %vm22, %v27
    %44 = vst.msk [vmem:[%s4 + $0x8] sm:$0xff] %vm22, %v28
    %45 = vst.msk [vmem:[%s4 + $0x10] sm:$0xff] %vm22, %v29
    %46 = vst.msk [vmem:[%s4 + $0x18] sm:$0xff] %vm22, %v30
    %47 = vst.msk [vmem:[%s4 + $0x20] sm:$0xff] %vm22, %v31
    %48 = vst.msk [vmem:[%s4 + $0x28] sm:$0xff] %vm22, %v32
    %49 = vst.msk [vmem:[%s4 + $0x30] sm:$0xff] %vm22, %v33
    %50 = vst.msk [vmem:[%s4 + $0x38] sm:$0xff] %vm22, %v34
    %51 = vst.msk [vmem:[%s4 + $0x40] sm:$0xff] %vm22, %v35
    %52 = vst.msk [vmem:[%s4 + $0x48] sm:$0xff] %vm22, %v36
    %53 = vst.msk [vmem:[%s4 + $0x50] sm:$0xff] %vm22, %v37
    %54 = vst.msk [vmem:[%s4 + $0x58] sm:$0xff] %vm22, %v38
    %55 = vst.msk [vmem:[%s4 + $0x60] sm:$0xff] %vm22, %v39
    %56 = vst.msk [vmem:[%s4 + $0x68] sm:$0xff] %vm22, %v40
    %57 = vst.msk [vmem:[%s4 + $0x70] sm:$0xff] %vm22, %v41
    %58 = vst.msk [vmem:[%s4 + $0x78] sm:$0xff] %vm22, %v42
  $region21: #{fwd.1} parent=0 // pred_fallthru
    _
  %v59 = vld [vmem:[%s4] sm:$0xff]
  %v60 = vld [vmem:[%s4 + $0x8] sm:$0xff]
  %v61 = vld [vmem:[%s4 + $0x10] sm:$0xff]
  %v62 = vld [vmem:[%s4 + $0x18] sm:$0xff]
  %v63 = vld [vmem:[%s4 + $0x20] sm:$0xff]
  %v64 = vld [vmem:[%s4 + $0x28] sm:$0xff]
  %v65 = vld [vmem:[%s4 + $0x30] sm:$0xff]
  %v66 = vld [vmem:[%s4 + $0x38] sm:$0xff]
  %v67 = vld [vmem:[%s4 + $0x40] sm:$0xff]
  %v68 = vld [vmem:[%s4 + $0x48] sm:$0xff]
  %v69 = vld [vmem:[%s4 + $0x50] sm:$0xff]
  %v70 = vld [vmem:[%s4 + $0x58] sm:$0xff]
  %v71 = vld [vmem:[%s4 + $0x60] sm:$0xff]
  %v72 = vld [vmem:[%s4 + $0x68] sm:$0xff]
  %v73 = vld [vmem:[%s4 + $0x70] sm:$0xff]
  %v74 = vld [vmem:[%s4 + $0x78] sm:$0xff]
  %v75 = vld [vmem:[%s3] sm:$0xff]
  %v76 = vld [vmem:[%s3 + $0x8] sm:$0xff]
  %v77 = vld [vmem:[%s3 + $0x10] sm:$0xff]
  %v78 = vld [vmem:[%s3 + $0x18] sm:$0xff]
  %v79 = vld [vmem:[%s3 + $0x20] sm:$0xff]
  %v80 = vld [vmem:[%s3 + $0x28] sm:$0xff]
  %v81 = vld [vmem:[%s3 + $0x30] sm:$0xff]
  %v82 = vld [vmem:[%s3 + $0x38] sm:$0xff]
  %v83 = vld [vmem:[%s3 + $0x40] sm:$0xff]
  %v84 = vld [vmem:[%s3 + $0x48] sm:$0xff]
  %v85 = vld [vmem:[%s3 + $0x50] sm:$0xff]
  %v86 = vld [vmem:[%s3 + $0x58] sm:$0xff]
  %v87 = vld [vmem:[%s3 + $0x60] sm:$0xff]
  %v88 = vld [vmem:[%s3 + $0x68] sm:$0xff]
  %v89 = vld [vmem:[%s3 + $0x70] sm:$0xff]
  %v90 = vld [vmem:[%s3 + $0x78] sm:$0xff]
  %v91 = vld [vmem:[%s3 + $0x80] sm:$0xff]
  %v92 = vld [vmem:[%s3 + $0x88] sm:$0xff]
  %v93 = vld [vmem:[%s3 + $0x90] sm:$0xff]
  %v94 = vld [vmem:[%s3 + $0x98] sm:$0xff]
  %v95 = vld [vmem:[%s3 + $0xa0] sm:$0xff]
  %v96 = vld [vmem:[%s3 + $0xa8] sm:$0xff]
  %v97 = vld [vmem:[%s3 + $0xb0] sm:$0xff]
  %v98 = vld [vmem:[%s3 + $0xb8] sm:$0xff]
  %v99 = vld [vmem:[%s3 + $0xc0] sm:$0xff]
  %v100 = vld [vmem:[%s3 + $0xc8] sm:$0xff]
  %v101 = vld [vmem:[%s3 + $0xd0] sm:$0xff]
  %v102 = vld [vmem:[%s3 + $0xd8] sm:$0xff]
  %v103 = vld [vmem:[%s3 + $0xe0] sm:$0xff]
  %v104 = vld [vmem:[%s3 + $0xe8] sm:$0xff]
  %v105 = vld [vmem:[%s3 + $0xf0] sm:$0xff]
  %v106 = vld [vmem:[%s3 + $0xf8] sm:$0xff]
  %v107 = vld [vmem:[%s3 + $0x100] sm:$0xff]
  %v108 = vld [vmem:[%s3 + $0x108] sm:$0xff]
  %v109 = vld [vmem:[%s3 + $0x110] sm:$0xff]
  %v110 = vld [vmem:[%s3 + $0x118] sm:$0xff]
  %v111 = vld [vmem:[%s3 + $0x120] sm:$0xff]
  %v112 = vld [vmem:[%s3 + $0x128] sm:$0xff]
  %v113 = vld [vmem:[%s3 + $0x130] sm:$0xff]
  %v114 = vld [vmem:[%s3 + $0x138] sm:$0xff]
  %v115 = vld [vmem:[%s3 + $0x140] sm:$0xff]
  %v116 = vld [vmem:[%s3 + $0x148] sm:$0xff]
  %v117 = vld [vmem:[%s3 + $0x150] sm:$0xff]
  %v118 = vld [vmem:[%s3 + $0x158] sm:$0xff]
  %v119 = vld [vmem:[%s3 + $0x160] sm:$0xff]
  %v120 = vld [vmem:[%s3 + $0x168] sm:$0xff]
  %v121 = vld [vmem:[%s3 + $0x170] sm:$0xff]
  %v122 = vld [vmem:[%s3 + $0x178] sm:$0xff]
  %v123 = vld [vmem:[%s2] sm:$0xf]
  %vm124 = vcmask 261120
  %125 = vst.msk [vmem:[#allocation2 + $0x10] sm:$0xff] %vm124, %v59
  %126 = vst.msk [vmem:[#allocation2 + $0x18] sm:$0xff] %vm124, %v60
  %127 = vst.msk [vmem:[#allocation2 + $0x20] sm:$0xff] %vm124, %v61
  %128 = vst.msk [vmem:[#allocation2 + $0x28] sm:$0xff] %vm124, %v62
  %129 = vst.msk [vmem:[#allocation2 + $0x30] sm:$0xff] %vm124, %v63
  %130 = vst.msk [vmem:[#allocation2 + $0x38] sm:$0xff] %vm124, %v64
  %131 = vst.msk [vmem:[#allocation2 + $0x40] sm:$0xff] %vm124, %v65
  %132 = vst.msk [vmem:[#allocation2 + $0x48] sm:$0xff] %vm124, %v66
  %133 = vst.msk [vmem:[#allocation2 + $0x50] sm:$0xff] %vm124, %v67
  %134 = vst.msk [vmem:[#allocation2 + $0x58] sm:$0xff] %vm124, %v68
  %135 = vst.msk [vmem:[#allocation2 + $0x60] sm:$0xff] %vm124, %v69
  %136 = vst.msk [vmem:[#allocation2 + $0x68] sm:$0xff] %vm124, %v70
  %137 = vst.msk [vmem:[#allocation2 + $0x70] sm:$0xff] %vm124, %v71
  %138 = vst.msk [vmem:[#allocation2 + $0x78] sm:$0xff] %vm124, %v72
  %139 = vst.msk [vmem:[#allocation2 + $0x80] sm:$0xff] %vm124, %v73
  %140 = vst.msk [vmem:[#allocation2 + $0x88] sm:$0xff] %vm124, %v74
  %v141 = vld [vmem:[%s1] sm:$0xf]
  %v142 = vld [vmem:[%s1 + $0x4] sm:$0xf]
  %v143 = vld [vmem:[%s1 + $0x8] sm:$0xf]
  %v144 = vld [vmem:[%s1 + $0xc] sm:$0xf]
  %v145 = vld [vmem:[%s1 + $0x10] sm:$0xf]
  %v146 = vld [vmem:[%s1 + $0x14] sm:$0xf]
  %v147 = vld [vmem:[%s1 + $0x18] sm:$0xf]
  %v148 = vld [vmem:[%s1 + $0x1c] sm:$0xf]
  %v149 = vld [vmem:[%s1 + $0x20] sm:$0xf]
  %v150 = vld [vmem:[%s1 + $0x24] sm:$0xf]
  %v151 = vld [vmem:[%s1 + $0x28] sm:$0xf]
  %v152 = vld [vmem:[%s1 + $0x2c] sm:$0xf]
  %v153 = vld [vmem:[%s1 + $0x30] sm:$0xf]
  %v154 = vld [vmem:[%s1 + $0x34] sm:$0xf]
  %v155 = vld [vmem:[%s1 + $0x38] sm:$0xf]
  %v156 = vld [vmem:[%s1 + $0x3c] sm:$0xf]
  %v157 = vld [vmem:[%s1 + $0x40] sm:$0xf]
  %v158 = vld [vmem:[%s1 + $0x44] sm:$0xf]
  %v159 = vld [vmem:[%s1 + $0x48] sm:$0xf]
  %v160 = vld [vmem:[%s1 + $0x4c] sm:$0xf]
  %v161 = vld [vmem:[%s1 + $0x50] sm:$0xf]
  %v162 = vld [vmem:[%s1 + $0x54] sm:$0xf]
  %v163 = vld [vmem:[%s1 + $0x58] sm:$0xf]
  %v164 = vld [vmem:[%s1 + $0x5c] sm:$0xf]
  %v165 = vld [vmem:[%s1 + $0x60] sm:$0xf]
  %v166 = vld [vmem:[%s1 + $0x64] sm:$0xf]
  %v167 = vld [vmem:[%s1 + $0x68] sm:$0xf]
  %v168 = vld [vmem:[%s1 + $0x6c] sm:$0xf]
  %v169 = vld [vmem:[%s1 + $0x70] sm:$0xf]
  %v170 = vld [vmem:[%s1 + $0x74] sm:$0xf]
  %v171 = vld [vmem:[%s1 + $0x78] sm:$0xf]
  %v172 = vld [vmem:[%s1 + $0x7c] sm:$0xf]
  %v173 = vld [vmem:[%s1 + $0x80] sm:$0xf]
  %v174 = vld [vmem:[%s1 + $0x84] sm:$0xf]
  %v175 = vld [vmem:[%s1 + $0x88] sm:$0xf]
  %v176 = vld [vmem:[%s1 + $0x8c] sm:$0xf]
  %v177 = vld [vmem:[#allocation2 + $0x7] sm:$0xff]
  %v178 = vld [vmem:[#allocation2 + $0xf] sm:$0xff]
  %v179 = vld [vmem:[#allocation2 + $0x17] sm:$0xff]
  %v180 = vld [vmem:[#allocation2 + $0x1f] sm:$0xff]
  %v181 = vld [vmem:[#allocation2 + $0x27] sm:$0xff]
  %v182 = vld [vmem:[#allocation2 + $0x2f] sm:$0xff]
  %v183 = vld [vmem:[#allocation2 + $0x37] sm:$0xff]
  %v184 = vld [vmem:[#allocation2 + $0x3f] sm:$0xff]
  %v185 = vld [vmem:[#allocation2 + $0x47] sm:$0xff]
  %v186 = vld [vmem:[#allocation2 + $0x4f] sm:$0xff]
  %v187 = vld [vmem:[#allocation2 + $0x57] sm:$0xff]
  %v188 = vld [vmem:[#allocation2 + $0x5f] sm:$0xff]
  %v189 = vld [vmem:[#allocation2 + $0x67] sm:$0xff]
  %v190 = vld [vmem:[#allocation2 + $0x6f] sm:$0xff]
  %v191 = vld [vmem:[#allocation2 + $0x77] sm:$0xff]
  %v192 = vld [vmem:[#allocation2 + $0x7f] sm:$0xff]
  %v193 = vld [vmem:[#allocation2 + $0x8] sm:$0xff]
  %v194 = vld [vmem:[#allocation2 + $0x10] sm:$0xff]
  %v195 = vld [vmem:[#allocation2 + $0x18] sm:$0xff]
  %v196 = vld [vmem:[#allocation2 + $0x20] sm:$0xff]
  %v197 = vld [vmem:[#allocation2 + $0x28] sm:$0xff]
  %v198 = vld [vmem:[#allocation2 + $0x30] sm:$0xff]
  %v199 = vld [vmem:[#allocation2 + $0x38] sm:$0xff]
  %v200 = vld [vmem:[#allocation2 + $0x40] sm:$0xff]
  %v201 = vld [vmem:[#allocation2 + $0x48] sm:$0xff]
  %v202 = vld [vmem:[#allocation2 + $0x50] sm:$0xff]
  %v203 = vld [vmem:[#allocation2 + $0x58] sm:$0xff]
  %v204 = vld [vmem:[#allocation2 + $0x60] sm:$0xff]
  %v205 = vld [vmem:[#allocation2 + $0x68] sm:$0xff]
  %v206 = vld [vmem:[#allocation2 + $0x70] sm:$0xff]
  %v207 = vld [vmem:[#allocation2 + $0x78] sm:$0xff]
  %v208 = vld [vmem:[#allocation2 + $0x80] sm:$0xff]
  %v209 = vld [vmem:[#allocation2 + $0x9] sm:$0xff]
  %v210 = vld [vmem:[#allocation2 + $0x11] sm:$0xff]
  %v211 = vld [vmem:[#allocation2 + $0x19] sm:$0xff]
  %v212 = vld [vmem:[#allocation2 + $0x21] sm:$0xff]
  %v213 = vld [vmem:[#allocation2 + $0x29] sm:$0xff]
  %v214 = vld [vmem:[#allocation2 + $0x31] sm:$0xff]
  %v215 = vld [vmem:[#allocation2 + $0x39] sm:$0xff]
  %v216 = vld [vmem:[#allocation2 + $0x41] sm:$0xff]
  %v217 = vld [vmem:[#allocation2 + $0x49] sm:$0xff]
  %v218 = vld [vmem:[#allocation2 + $0x51] sm:$0xff]
  %v219 = vld [vmem:[#allocation2 + $0x59] sm:$0xff]
  %v220 = vld [vmem:[#allocation2 + $0x61] sm:$0xff]
  %v221 = vld [vmem:[#allocation2 + $0x69] sm:$0xff]
  %v222 = vld [vmem:[#allocation2 + $0x71] sm:$0xff]
  %v223 = vld [vmem:[#allocation2 + $0x79] sm:$0xff]
  %v224 = vld [vmem:[#allocation2 + $0x81] sm:$0xff]
  %v225 = vld [vmem:[#allocation2 + $0x87] sm:$0xff]
  %v226 = vld [vmem:[#allocation2 + $0x88] sm:$0xff]
  %v227 = vld [vmem:[#allocation2 + $0x89] sm:$0xff]
  %v228 = vld [vmem:[#allocation2 + $0x8f] sm:$0xff]
  %v229 = vld [vmem:[#allocation2 + $0x90] sm:$0xff]
  %v230 = vld [vmem:[#allocation2 + $0x91] sm:$0xff]
  %247 = vrot.lane.b32.xlu0 %v193, 32
  %v248 = vpop.permute.xlu0 %247
  %249 = vrot.lane.b32.xlu0 %v194, 32
  %v250 = vpop.permute.xlu0 %249
  %251 = vrot.lane.b32.xlu0 %v195, 32
  %v252 = vpop.permute.xlu0 %251
  %253 = vrot.lane.b32.xlu0 %v196, 32
  %v254 = vpop.permute.xlu0 %253
  %255 = vrot.lane.b32.xlu0 %v197, 32
  %v256 = vpop.permute.xlu0 %255
  %257 = vrot.lane.b32.xlu0 %v198, 32
  %v258 = vpop.permute.xlu0 %257
  %259 = vrot.lane.b32.xlu0 %v199, 32
  %v260 = vpop.permute.xlu0 %259
  %261 = vrot.lane.b32.xlu0 %v200, 32
  %v262 = vpop.permute.xlu0 %261
  %263 = vrot.lane.b32.xlu0 %v201, 32
  %v264 = vpop.permute.xlu0 %263
  %265 = vrot.lane.b32.xlu0 %v202, 32
  %v266 = vpop.permute.xlu0 %265
  %267 = vrot.lane.b32.xlu0 %v203, 32
  %v268 = vpop.permute.xlu0 %267
  %269 = vrot.lane.b32.xlu0 %v204, 32
  %v270 = vpop.permute.xlu0 %269
  %271 = vrot.lane.b32.xlu0 %v205, 32
  %v272 = vpop.permute.xlu0 %271
  %273 = vrot.lane.b32.xlu0 %v206, 32
  %v274 = vpop.permute.xlu0 %273
  %275 = vrot.lane.b32.xlu0 %v207, 32
  %v276 = vpop.permute.xlu0 %275
  %277 = vrot.lane.b32.xlu0 %v208, 32
  %v278 = vpop.permute.xlu0 %277
  %311 = vrot.lane.b32.xlu0 %v209, 64
  %v312 = vpop.permute.xlu0 %311
  %313 = vrot.lane.b32.xlu0 %v210, 64
  %v314 = vpop.permute.xlu0 %313
  %315 = vrot.lane.b32.xlu0 %v211, 64
  %v316 = vpop.permute.xlu0 %315
  %317 = vrot.lane.b32.xlu0 %v212, 64
  %v318 = vpop.permute.xlu0 %317
  %319 = vrot.lane.b32.xlu0 %v213, 64
  %v320 = vpop.permute.xlu0 %319
  %321 = vrot.lane.b32.xlu0 %v214, 64
  %v322 = vpop.permute.xlu0 %321
  %323 = vrot.lane.b32.xlu0 %v215, 64
  %v324 = vpop.permute.xlu0 %323
  %325 = vrot.lane.b32.xlu0 %v216, 64
  %v326 = vpop.permute.xlu0 %325
  %327 = vrot.lane.b32.xlu0 %v217, 64
  %v328 = vpop.permute.xlu0 %327
  %329 = vrot.lane.b32.xlu0 %v218, 64
  %v330 = vpop.permute.xlu0 %329
  %331 = vrot.lane.b32.xlu0 %v219, 64
  %v332 = vpop.permute.xlu0 %331
  %333 = vrot.lane.b32.xlu0 %v220, 64
  %v334 = vpop.permute.xlu0 %333
  %335 = vrot.lane.b32.xlu0 %v221, 64
  %v336 = vpop.permute.xlu0 %335
  %337 = vrot.lane.b32.xlu0 %v222, 64
  %v338 = vpop.permute.xlu0 %337
  %339 = vrot.lane.b32.xlu0 %v223, 64
  %v340 = vpop.permute.xlu0 %339
  %341 = vrot.lane.b32.xlu0 %v224, 64
  %v342 = vpop.permute.xlu0 %341
  %375 = vrot.lane.b32.xlu0 %v178, 96
  %v376 = vpop.permute.xlu0 %375
  %377 = vrot.lane.b32.xlu0 %v179, 96
  %v378 = vpop.permute.xlu0 %377
  %379 = vrot.lane.b32.xlu0 %v180, 96
  %v380 = vpop.permute.xlu0 %379
  %381 = vrot.lane.b32.xlu0 %v181, 96
  %v382 = vpop.permute.xlu0 %381
  %383 = vrot.lane.b32.xlu0 %v182, 96
  %v384 = vpop.permute.xlu0 %383
  %385 = vrot.lane.b32.xlu0 %v183, 96
  %v386 = vpop.permute.xlu0 %385
  %387 = vrot.lane.b32.xlu0 %v184, 96
  %v388 = vpop.permute.xlu0 %387
  %389 = vrot.lane.b32.xlu0 %v185, 96
  %v390 = vpop.permute.xlu0 %389
  %391 = vrot.lane.b32.xlu0 %v186, 96
  %v392 = vpop.permute.xlu0 %391
  %393 = vrot.lane.b32.xlu0 %v187, 96
  %v394 = vpop.permute.xlu0 %393
  %395 = vrot.lane.b32.xlu0 %v188, 96
  %v396 = vpop.permute.xlu0 %395
  %397 = vrot.lane.b32.xlu0 %v189, 96
  %v398 = vpop.permute.xlu0 %397
  %399 = vrot.lane.b32.xlu0 %v190, 96
  %v400 = vpop.permute.xlu0 %399
  %401 = vrot.lane.b32.xlu0 %v191, 96
  %v402 = vpop.permute.xlu0 %401
  %403 = vrot.lane.b32.xlu0 %v192, 96
  %v404 = vpop.permute.xlu0 %403
  %405 = vrot.lane.b32.xlu0 %v225, 96
  %v406 = vpop.permute.xlu0 %405
  %424 = vrot.lane.b32.xlu0 %v210, 32
  %v425 = vpop.permute.xlu0 %424
  %426 = vrot.lane.b32.xlu0 %v211, 32
  %v427 = vpop.permute.xlu0 %426
  %428 = vrot.lane.b32.xlu0 %v212, 32
  %v429 = vpop.permute.xlu0 %428
  %430 = vrot.lane.b32.xlu0 %v213, 32
  %v431 = vpop.permute.xlu0 %430
  %432 = vrot.lane.b32.xlu0 %v214, 32
  %v433 = vpop.permute.xlu0 %432
  %434 = vrot.lane.b32.xlu0 %v215, 32
  %v435 = vpop.permute.xlu0 %434
  %436 = vrot.lane.b32.xlu0 %v216, 32
  %v437 = vpop.permute.xlu0 %436
  %438 = vrot.lane.b32.xlu0 %v217, 32
  %v439 = vpop.permute.xlu0 %438
  %440 = vrot.lane.b32.xlu0 %v218, 32
  %v441 = vpop.permute.xlu0 %440
  %442 = vrot.lane.b32.xlu0 %v219, 32
  %v443 = vpop.permute.xlu0 %442
  %444 = vrot.lane.b32.xlu0 %v220, 32
  %v445 = vpop.permute.xlu0 %444
  %446 = vrot.lane.b32.xlu0 %v221, 32
  %v447 = vpop.permute.xlu0 %446
  %448 = vrot.lane.b32.xlu0 %v222, 32
  %v449 = vpop.permute.xlu0 %448
  %450 = vrot.lane.b32.xlu0 %v223, 32
  %v451 = vpop.permute.xlu0 %450
  %452 = vrot.lane.b32.xlu0 %v224, 32
  %v453 = vpop.permute.xlu0 %452
  %454 = vrot.lane.b32.xlu0 %v227, 32
  %v455 = vpop.permute.xlu0 %454
  %473 = vrot.lane.b32.xlu0 %v179, 64
  %v474 = vpop.permute.xlu0 %473
  %475 = vrot.lane.b32.xlu0 %v180, 64
  %v476 = vpop.permute.xlu0 %475
  %477 = vrot.lane.b32.xlu0 %v181, 64
  %v478 = vpop.permute.xlu0 %477
  %479 = vrot.lane.b32.xlu0 %v182, 64
  %v480 = vpop.permute.xlu0 %479
  %481 = vrot.lane.b32.xlu0 %v183, 64
  %v482 = vpop.permute.xlu0 %481
  %483 = vrot.lane.b32.xlu0 %v184, 64
  %v484 = vpop.permute.xlu0 %483
  %485 = vrot.lane.b32.xlu0 %v185, 64
  %v486 = vpop.permute.xlu0 %485
  %487 = vrot.lane.b32.xlu0 %v186, 64
  %v488 = vpop.permute.xlu0 %487
  %489 = vrot.lane.b32.xlu0 %v187, 64
  %v490 = vpop.permute.xlu0 %489
  %491 = vrot.lane.b32.xlu0 %v188, 64
  %v492 = vpop.permute.xlu0 %491
  %493 = vrot.lane.b32.xlu0 %v189, 64
  %v494 = vpop.permute.xlu0 %493
  %495 = vrot.lane.b32.xlu0 %v190, 64
  %v496 = vpop.permute.xlu0 %495
  %497 = vrot.lane.b32.xlu0 %v191, 64
  %v498 = vpop.permute.xlu0 %497
  %499 = vrot.lane.b32.xlu0 %v192, 64
  %v500 = vpop.permute.xlu0 %499
  %501 = vrot.lane.b32.xlu0 %v225, 64
  %v502 = vpop.permute.xlu0 %501
  %503 = vrot.lane.b32.xlu0 %v228, 64
  %v504 = vpop.permute.xlu0 %503
  %523 = vrot.lane.b32.xlu0 %v195, 96
  %v524 = vpop.permute.xlu0 %523
  %525 = vrot.lane.b32.xlu0 %v196, 96
  %v526 = vpop.permute.xlu0 %525
  %527 = vrot.lane.b32.xlu0 %v197, 96
  %v528 = vpop.permute.xlu0 %527
  %529 = vrot.lane.b32.xlu0 %v198, 96
  %v530 = vpop.permute.xlu0 %529
  %531 = vrot.lane.b32.xlu0 %v199, 96
  %v532 = vpop.permute.xlu0 %531
  %533 = vrot.lane.b32.xlu0 %v200, 96
  %v534 = vpop.permute.xlu0 %533
  %535 = vrot.lane.b32.xlu0 %v201, 96
  %v536 = vpop.permute.xlu0 %535
  %537 = vrot.lane.b32.xlu0 %v202, 96
  %v538 = vpop.permute.xlu0 %537
  %539 = vrot.lane.b32.xlu0 %v203, 96
  %v540 = vpop.permute.xlu0 %539
  %541 = vrot.lane.b32.xlu0 %v204, 96
  %v542 = vpop.permute.xlu0 %541
  %543 = vrot.lane.b32.xlu0 %v205, 96
  %v544 = vpop.permute.xlu0 %543
  %545 = vrot.lane.b32.xlu0 %v206, 96
  %v546 = vpop.permute.xlu0 %545
  %547 = vrot.lane.b32.xlu0 %v207, 96
  %v548 = vpop.permute.xlu0 %547
  %549 = vrot.lane.b32.xlu0 %v208, 96
  %v550 = vpop.permute.xlu0 %549
  %551 = vrot.lane.b32.xlu0 %v226, 96
  %v552 = vpop.permute.xlu0 %551
  %553 = vrot.lane.b32.xlu0 %v229, 96
  %v554 = vpop.permute.xlu0 %553
  %v571 = vsel %vm124, %v177, %v248
  %v572 = vsel %vm124, %v178, %v250
  %v573 = vsel %vm124, %v179, %v252
  %v574 = vsel %vm124, %v180, %v254
  %v575 = vsel %vm124, %v181, %v256
  %v576 = vsel %vm124, %v182, %v258
  %v577 = vsel %vm124, %v183, %v260
  %v578 = vsel %vm124, %v184, %v262
  %v579 = vsel %vm124, %v185, %v264
  %v580 = vsel %vm124, %v186, %v266
  %v581 = vsel %vm124, %v187, %v268
  %v582 = vsel %vm124, %v188, %v270
  %v583 = vsel %vm124, %v189, %v272
  %v584 = vsel %vm124, %v190, %v274
  %v585 = vsel %vm124, %v191, %v276
  %v586 = vsel %vm124, %v192, %v278
  %vm587 = vcmask 523264
  %v588 = vsel %vm587, %v571, %v312
  %v589 = vsel %vm587, %v572, %v314
  %v590 = vsel %vm587, %v573, %v316
  %v591 = vsel %vm587, %v574, %v318
  %v592 = vsel %vm587, %v575, %v320
  %v593 = vsel %vm587, %v576, %v322
  %v594 = vsel %vm587, %v577, %v324
  %v595 = vsel %vm587, %v578, %v326
  %v596 = vsel %vm587, %v579, %v328
  %v597 = vsel %vm587, %v580, %v330
  %v598 = vsel %vm587, %v581, %v332
  %v599 = vsel %vm587, %v582, %v334
  %v600 = vsel %vm587, %v583, %v336
  %v601 = vsel %vm587, %v584, %v338
  %v602 = vsel %vm587, %v585, %v340
  %v603 = vsel %vm587, %v586, %v342
  %vm604 = vcmask 785408
  %v605 = vsel %vm604, %v588, %v376
  %v606 = vsel %vm604, %v589, %v378
  %v607 = vsel %vm604, %v590, %v380
  %v608 = vsel %vm604, %v591, %v382
  %v609 = vsel %vm604, %v592, %v384
  %v610 = vsel %vm604, %v593, %v386
  %v611 = vsel %vm604, %v594, %v388
  %v612 = vsel %vm604, %v595, %v390
  %v613 = vsel %vm604, %v596, %v392
  %v614 = vsel %vm604, %v597, %v394
  %v615 = vsel %vm604, %v598, %v396
  %v616 = vsel %vm604, %v599, %v398
  %v617 = vsel %vm604, %v600, %v400
  %v618 = vsel %vm604, %v601, %v402
  %v619 = vsel %vm604, %v602, %v404
  %v620 = vsel %vm604, %v603, %v406
  %v621 = vsel %vm124, %v194, %v425
  %v622 = vsel %vm124, %v195, %v427
  %v623 = vsel %vm124, %v196, %v429
  %v624 = vsel %vm124, %v197, %v431
  %v625 = vsel %vm124, %v198, %v433
  %v626 = vsel %vm124, %v199, %v435
  %v627 = vsel %vm124, %v200, %v437
  %v628 = vsel %vm124, %v201, %v439
  %v629 = vsel %vm124, %v202, %v441
  %v630 = vsel %vm124, %v203, %v443
  %v631 = vsel %vm124, %v204, %v445
  %v632 = vsel %vm124, %v205, %v447
  %v633 = vsel %vm124, %v206, %v449
  %v634 = vsel %vm124, %v207, %v451
  %v635 = vsel %vm124, %v208, %v453
  %v636 = vsel %vm124, %v226, %v455
  %v637 = vsel %vm587, %v621, %v474
  %v638 = vsel %vm587, %v622, %v476
  %v639 = vsel %vm587, %v623, %v478
  %v640 = vsel %vm587, %v624, %v480
  %v641 = vsel %vm587, %v625, %v482
  %v642 = vsel %vm587, %v626, %v484
  %v643 = vsel %vm587, %v627, %v486
  %v644 = vsel %vm587, %v628, %v488
  %v645 = vsel %vm587, %v629, %v490
  %v646 = vsel %vm587, %v630, %v492
  %v647 = vsel %vm587, %v631, %v494
  %v648 = vsel %vm587, %v632, %v496
  %v649 = vsel %vm587, %v633, %v498
  %v650 = vsel %vm587, %v634, %v500
  %v651 = vsel %vm587, %v635, %v502
  %v652 = vsel %vm587, %v636, %v504
  %v653 = vsel %vm604, %v637, %v524
  %v654 = vsel %vm604, %v638, %v526
  %v655 = vsel %vm604, %v639, %v528
  %v656 = vsel %vm604, %v640, %v530
  %v657 = vsel %vm604, %v641, %v532
  %v658 = vsel %vm604, %v642, %v534
  %v659 = vsel %vm604, %v643, %v536
  %v660 = vsel %vm604, %v644, %v538
  %v661 = vsel %vm604, %v645, %v540
  %v662 = vsel %vm604, %v646, %v542
  %v663 = vsel %vm604, %v647, %v544
  %v664 = vsel %vm604, %v648, %v546
  %v665 = vsel %vm604, %v649, %v548
  %v666 = vsel %vm604, %v650, %v550
  %v667 = vsel %vm604, %v651, %v552
  %v668 = vsel %vm604, %v652, %v554
  %v669 = vmul.f32 %v605, %v75
  %v670 = vmul.f32 %v653, %v76
  %v671 = vmul.f32 %v211, %v77
  %v672 = vmul.f32 %v606, %v78
  %v673 = vmul.f32 %v654, %v79
  %v674 = vmul.f32 %v212, %v80
  %v675 = vmul.f32 %v607, %v81
  %v676 = vmul.f32 %v655, %v82
  %v677 = vmul.f32 %v213, %v83
  %v678 = vmul.f32 %v608, %v84
  %v679 = vmul.f32 %v656, %v85
  %v680 = vmul.f32 %v214, %v86
  %v681 = vmul.f32 %v609, %v87
  %v682 = vmul.f32 %v657, %v88
  %v683 = vmul.f32 %v215, %v89
  %v684 = vmul.f32 %v610, %v90
  %v685 = vmul.f32 %v658, %v91
  %v686 = vmul.f32 %v216, %v92
  %v687 = vmul.f32 %v611, %v93
  %v688 = vmul.f32 %v659, %v94
  %v689 = vmul.f32 %v217, %v95
  %v690 = vmul.f32 %v612, %v96
  %v691 = vmul.f32 %v660, %v97
  %v692 = vmul.f32 %v218, %v98
  %v693 = vmul.f32 %v613, %v99
  %v694 = vmul.f32 %v661, %v100
  %v695 = vmul.f32 %v219, %v101
  %v696 = vmul.f32 %v614, %v102
  %v697 = vmul.f32 %v662, %v103
  %v698 = vmul.f32 %v220, %v104
  %v699 = vmul.f32 %v615, %v105
  %v700 = vmul.f32 %v663, %v106
  %v701 = vmul.f32 %v221, %v107
  %v702 = vmul.f32 %v616, %v108
  %v703 = vmul.f32 %v664, %v109
  %v704 = vmul.f32 %v222, %v110
  %v705 = vmul.f32 %v617, %v111
  %v706 = vmul.f32 %v665, %v112
  %v707 = vmul.f32 %v223, %v113
  %v708 = vmul.f32 %v618, %v114
  %v709 = vmul.f32 %v666, %v115
  %v710 = vmul.f32 %v224, %v116
  %v711 = vmul.f32 %v619, %v117
  %v712 = vmul.f32 %v667, %v118
  %v713 = vmul.f32 %v227, %v119
  %v714 = vmul.f32 %v620, %v120
  %v715 = vmul.f32 %v668, %v121
  %v716 = vmul.f32 %v230, %v122
  %v717 = vpack.c.bf16 %v672, %v669
  %v718 = vpack.c.bf16 %v673, %v670
  %v719 = vpack.c.bf16 %v674, %v671
  %v720 = vpack.c.bf16 %v678, %v675
  %v721 = vpack.c.bf16 %v679, %v676
  %v722 = vpack.c.bf16 %v680, %v677
  %v723 = vpack.c.bf16 %v684, %v681
  %v724 = vpack.c.bf16 %v685, %v682
  %v725 = vpack.c.bf16 %v686, %v683
  %v726 = vpack.c.bf16 %v690, %v687
  %v727 = vpack.c.bf16 %v691, %v688
  %v728 = vpack.c.bf16 %v692, %v689
  %v729 = vpack.c.bf16 %v696, %v693
  %v730 = vpack.c.bf16 %v697, %v694
  %v731 = vpack.c.bf16 %v698, %v695
  %v732 = vpack.c.bf16 %v702, %v699
  %v733 = vpack.c.bf16 %v703, %v700
  %v734 = vpack.c.bf16 %v704, %v701
  %v735 = vpack.c.bf16 %v708, %v705
  %v736 = vpack.c.bf16 %v709, %v706
  %v737 = vpack.c.bf16 %v710, %v707
  %v738 = vpack.c.bf16 %v714, %v711
  %v739 = vpack.c.bf16 %v715, %v712
  %v740 = vpack.c.bf16 %v716, %v713
  %v777 = vunpack.c.l.b16 %v141
  %v778 = vunpack.c.l.b16 %v142
  %v779 = vunpack.c.l.b16 %v143
  %v780 = vunpack.c.l.b16 %v144
  %v781 = vunpack.c.l.b16 %v145
  %v782 = vunpack.c.l.b16 %v146
  %v783 = vunpack.c.l.b16 %v147
  %v784 = vunpack.c.l.b16 %v148
  %v785 = vunpack.c.l.b16 %v149
  %v786 = vunpack.c.l.b16 %v150
  %v787 = vunpack.c.l.b16 %v151
  %v788 = vunpack.c.l.b16 %v152
  %v789 = vunpack.c.l.b16 %v153
  %v790 = vunpack.c.l.b16 %v154
  %v791 = vunpack.c.l.b16 %v155
  %v792 = vunpack.c.l.b16 %v156
  %v793 = vunpack.c.l.b16 %v157
  %v794 = vunpack.c.l.b16 %v158
  %v795 = vunpack.c.l.b16 %v159
  %v796 = vunpack.c.l.b16 %v160
  %v797 = vunpack.c.l.b16 %v161
  %v798 = vunpack.c.l.b16 %v162
  %v799 = vunpack.c.l.b16 %v163
  %v800 = vunpack.c.l.b16 %v164
  %v801 = vunpack.c.l.b16 %v165
  %v802 = vunpack.c.l.b16 %v166
  %v803 = vunpack.c.l.b16 %v167
  %v804 = vunpack.c.l.b16 %v168
  %v805 = vunpack.c.l.b16 %v169
  %v806 = vunpack.c.l.b16 %v170
  %v807 = vunpack.c.l.b16 %v171
  %v808 = vunpack.c.l.b16 %v172
  %v809 = vunpack.c.l.b16 %v173
  %v810 = vunpack.c.l.b16 %v174
  %v811 = vunpack.c.l.b16 %v175
  %v812 = vunpack.c.l.b16 %v176
  %v813 = vpack.c.b16 %v778, %v777
  %v814 = vpack.c.b16 %v780, %v779
  %v815 = vpack.c.b16 %v782, %v781
  %v816 = vpack.c.b16 %v784, %v783
  %v817 = vpack.c.b16 %v786, %v785
  %v818 = vpack.c.b16 %v788, %v787
  %v819 = vpack.c.b16 %v790, %v789
  %v820 = vpack.c.b16 %v792, %v791
  %v821 = vpack.c.b16 %v794, %v793
  %v822 = vpack.c.b16 %v796, %v795
  %v823 = vpack.c.b16 %v798, %v797
  %v824 = vpack.c.b16 %v800, %v799
  %v825 = vpack.c.b16 %v802, %v801
  %v826 = vpack.c.b16 %v804, %v803
  %v827 = vpack.c.b16 %v806, %v805
  %v828 = vpack.c.b16 %v808, %v807
  %v829 = vpack.c.b16 %v810, %v809
  %v830 = vpack.c.b16 %v812, %v811
  %v850 = vsel %vm124, %v719, 0
  %v853 = vsel %vm124, %v722, 0
  %v856 = vsel %vm124, %v725, 0
  %v859 = vsel %vm124, %v728, 0
  %v862 = vsel %vm124, %v731, 0
  %v865 = vsel %vm124, %v734, 0
  %v868 = vsel %vm124, %v737, 0
  %v871 = vsel %vm124, %v740, 0
  %873 = vmatprep.subr.bf16.mxu0 0
  %874 = vmatpush1.bf16.msra.mxu0 %v813
  %875 = vmatprep.subr.bf16.mxu0 0
  %876 = vmatpush1.bf16.msra.mxu0 %v814
  %877 = vmatprep.subr.bf16.mxu0 0
  %878 = vmatpush1.bf16.msra.mxu0 %v815
  %879 = vmatprep.subr.bf16.mxu0 0
  %880 = vmatpush1.bf16.msra.mxu0 %v816
  %881 = vmatprep.subr.bf16.mxu0 0
  %882 = vmatpush1.bf16.msra.mxu0 %v817
  %883 = vmatprep.subr.bf16.mxu0 0
  %884 = vmatpush1.bf16.msra.mxu0 %v818
  %885 = vmatprep.subr.bf16.mxu0 0
  %886 = vmatpush1.bf16.msra.mxu0 %v819
  %887 = vmatprep.subr.bf16.mxu0 0
  %888 = vmatpush1.bf16.msra.mxu0 %v820
  %889 = vmatprep.subr.bf16.mxu0 0
  %890 = vmatpush1.bf16.msra.mxu0 %v821
  %891 = vmatprep.subr.bf16.mxu0 0
  %892 = vmatpush1.bf16.msra.mxu0 %v822
  %893 = vmatprep.subr.bf16.mxu0 0
  %894 = vmatpush1.bf16.msra.mxu0 %v823
  %895 = vmatprep.subr.bf16.mxu0 0
  %896 = vmatpush1.bf16.msra.mxu0 %v824
  %897 = vmatprep.subr.bf16.mxu0 0
  %898 = vmatpush1.bf16.msra.mxu0 %v825
  %899 = vmatprep.subr.bf16.mxu0 0
  %900 = vmatpush1.bf16.msra.mxu0 %v826
  %901 = vmatprep.subr.bf16.mxu0 0
  %902 = vmatpush1.bf16.msra.mxu0 %v827
  %903 = vmatprep.subr.bf16.mxu0 0
  %904 = vmatpush1.bf16.msra.mxu0 %v828
  %905 = vmatprep.mubr.bf16.mxu0 %v718
  %906 = vmatmul.mubr.bf16.gmra.mrb[0].mxu0 %v717
  %v907 = vpop.f32.mrb[0].mxu0
  %v908 = vadd.f32 0.0, %v907
  %v909 = vpop.f32.mrb[0].mxu0
  %v910 = vpop.f32.mrb[0].mxu0
  %v911 = vadd.f32 0.0, %v910
  %v912 = vpop.f32.mrb[0].mxu0
  %913 = vmatprep.mubr.bf16.mxu0 %v721
  %914 = vmatmul.mubr.bf16.gmra.mrb[0].mxu0 %v720
  %v915 = vpop.f32.mrb[0].mxu0
  %v916 = vadd.f32 0.0, %v915
  %v917 = vpop.f32.mrb[0].mxu0
  %v918 = vpop.f32.mrb[0].mxu0
  %v919 = vadd.f32 0.0, %v918
  %v920 = vpop.f32.mrb[0].mxu0
  %921 = vmatprep.mubr.bf16.mxu0 %v724
  %922 = vmatmul.mubr.bf16.gmra.mrb[0].mxu0 %v723
  %v923 = vpop.f32.mrb[0].mxu0
  %v924 = vadd.f32 0.0, %v923
  %v925 = vpop.f32.mrb[0].mxu0
  %v926 = vpop.f32.mrb[0].mxu0
  %v927 = vadd.f32 0.0, %v926
  %v928 = vpop.f32.mrb[0].mxu0
  %929 = vmatprep.mubr.bf16.mxu0 %v727
  %930 = vmatmul.mubr.bf16.gmra.mrb[0].mxu0 %v726
  %v931 = vpop.f32.mrb[0].mxu0
  %v932 = vadd.f32 0.0, %v931
  %v933 = vpop.f32.mrb[0].mxu0
  %v934 = vpop.f32.mrb[0].mxu0
  %v935 = vadd.f32 0.0, %v934
  %v936 = vpop.f32.mrb[0].mxu0
  %937 = vmatprep.mubr.bf16.mxu0 %v730
  %938 = vmatmul.mubr.bf16.gmra.mrb[0].mxu0 %v729
  %v939 = vpop.f32.mrb[0].mxu0
  %v940 = vadd.f32 0.0, %v939
  %v941 = vpop.f32.mrb[0].mxu0
  %v942 = vpop.f32.mrb[0].mxu0
  %v943 = vadd.f32 0.0, %v942
  %v944 = vpop.f32.mrb[0].mxu0
  %945 = vmatprep.mubr.bf16.mxu0 %v733
  %946 = vmatmul.mubr.bf16.gmra.mrb[0].mxu0 %v732
  %v947 = vpop.f32.mrb[0].mxu0
  %v948 = vadd.f32 0.0, %v947
  %v949 = vpop.f32.mrb[0].mxu0
  %v950 = vpop.f32.mrb[0].mxu0
  %v951 = vadd.f32 0.0, %v950
  %v952 = vpop.f32.mrb[0].mxu0
  %953 = vmatprep.mubr.bf16.mxu0 %v736
  %954 = vmatmul.mubr.bf16.gmra.mrb[0].mxu0 %v735
  %v955 = vpop.f32.mrb[0].mxu0
  %v956 = vadd.f32 0.0, %v955
  %v957 = vpop.f32.mrb[0].mxu0
  %v958 = vpop.f32.mrb[0].mxu0
  %v959 = vadd.f32 0.0, %v958
  %v960 = vpop.f32.mrb[0].mxu0
  %961 = vmatprep.mubr.bf16.mxu0 %v739
  %962 = vmatmul.mubr.bf16.gmra.mrb[0].mxu0 %v738
  %v963 = vpop.f32.mrb[0].mxu0
  %v964 = vadd.f32 0.0, %v963
  %v965 = vpop.f32.mrb[0].mxu0
  %v966 = vpop.f32.mrb[0].mxu0
  %v967 = vadd.f32 0.0, %v966
  %v968 = vpop.f32.mrb[0].mxu0
  %969 = vdwg.mxu0
  %970 = vmatprep.subr.bf16.mxu0 0
  %971 = vmatpush1.bf16.msra.mxu0 %v829
  %972 = vmatprep.subr.bf16.mxu0 0
  %973 = vmatpush1.bf16.msra.mxu0 %v830
  %974 = vmatprep.subr.bf16.mxu0 0
  %975 = vmatpush1.bf16.msra.mxu0 0
  %976 = vmatprep.subr.bf16.mxu0 0
  %977 = vmatpush1.bf16.msra.mxu0 0
  %978 = vmatprep.subr.bf16.mxu0 0
  %979 = vmatpush1.bf16.msra.mxu0 0
  %980 = vmatprep.subr.bf16.mxu0 0
  %981 = vmatpush1.bf16.msra.mxu0 0
  %982 = vmatprep.subr.bf16.mxu0 0
  %983 = vmatpush1.bf16.msra.mxu0 0
  %984 = vmatprep.subr.bf16.mxu0 0
  %985 = vmatpush1.bf16.msra.mxu0 0
  %986 = vmatprep.subr.bf16.mxu0 0
  %987 = vmatpush1.bf16.msra.mxu0 0
  %988 = vmatprep.subr.bf16.mxu0 0
  %989 = vmatpush1.bf16.msra.mxu0 0
  %990 = vmatprep.subr.bf16.mxu0 0
  %991 = vmatpush1.bf16.msra.mxu0 0
  %992 = vmatprep.subr.bf16.mxu0 0
  %993 = vmatpush1.bf16.msra.mxu0 0
  %994 = vmatprep.subr.bf16.mxu0 0
  %995 = vmatpush1.bf16.msra.mxu0 0
  %996 = vmatprep.subr.bf16.mxu0 0
  %997 = vmatpush1.bf16.msra.mxu0 0
  %998 = vmatprep.subr.bf16.mxu0 0
  %999 = vmatpush1.bf16.msra.mxu0 0
  %1000 = vmatprep.subr.bf16.mxu0 0
  %1001 = vmatpush1.bf16.msra.mxu0 0
  %1002 = vmatprep.mubr.bf16.mxu0 0
  %1003 = vmatmul.mubr.bf16.gmra.mrb[0].mxu0 %v850
  %v1004 = vpop.f32.mrb[0].mxu0
  %v1005 = vadd.f32 %v908, %v1004
  %v1006 = vpop.f32.mrb[0].mxu0
  %v1007 = vpop.f32.mrb[0].mxu0
  %v1008 = vadd.f32 %v911, %v1007
  %v1009 = vpop.f32.mrb[0].mxu0
  %1010 = vmatprep.mubr.bf16.mxu0 0
  %1011 = vmatmul.mubr.bf16.gmra.mrb[0].mxu0 %v853
  %v1012 = vpop.f32.mrb[0].mxu0
  %v1013 = vadd.f32 %v916, %v1012
  %v1014 = vpop.f32.mrb[0].mxu0
  %v1015 = vpop.f32.mrb[0].mxu0
  %v1016 = vadd.f32 %v919, %v1015
  %v1017 = vpop.f32.mrb[0].mxu0
  %1018 = vmatprep.mubr.bf16.mxu0 0
  %1019 = vmatmul.mubr.bf16.gmra.mrb[0].mxu0 %v856
  %v1020 = vpop.f32.mrb[0].mxu0
  %v1021 = vadd.f32 %v924, %v1020
  %v1022 = vpop.f32.mrb[0].mxu0
  %v1023 = vpop.f32.mrb[0].mxu0
  %v1024 = vadd.f32 %v927, %v1023
  %v1025 = vpop.f32.mrb[0].mxu0
  %1026 = vmatprep.mubr.bf16.mxu0 0
  %1027 = vmatmul.mubr.bf16.gmra.mrb[0].mxu0 %v859
  %v1028 = vpop.f32.mrb[0].mxu0
  %v1029 = vadd.f32 %v932, %v1028
  %v1030 = vpop.f32.mrb[0].mxu0
  %v1031 = vpop.f32.mrb[0].mxu0
  %v1032 = vadd.f32 %v935, %v1031
  %v1033 = vpop.f32.mrb[0].mxu0
  %1034 = vmatprep.mubr.bf16.mxu0 0
  %1035 = vmatmul.mubr.bf16.gmra.mrb[0].mxu0 %v862
  %v1036 = vpop.f32.mrb[0].mxu0
  %v1037 = vadd.f32 %v940, %v1036
  %v1038 = vpop.f32.mrb[0].mxu0
  %v1039 = vpop.f32.mrb[0].mxu0
  %v1040 = vadd.f32 %v943, %v1039
  %v1041 = vpop.f32.mrb[0].mxu0
  %1042 = vmatprep.mubr.bf16.mxu0 0
  %1043 = vmatmul.mubr.bf16.gmra.mrb[0].mxu0 %v865
  %v1044 = vpop.f32.mrb[0].mxu0
  %v1045 = vadd.f32 %v948, %v1044
  %v1046 = vpop.f32.mrb[0].mxu0
  %v1047 = vpop.f32.mrb[0].mxu0
  %v1048 = vadd.f32 %v951, %v1047
  %v1049 = vpop.f32.mrb[0].mxu0
  %1050 = vmatprep.mubr.bf16.mxu0 0
  %1051 = vmatmul.mubr.bf16.gmra.mrb[0].mxu0 %v868
  %v1052 = vpop.f32.mrb[0].mxu0
  %v1053 = vadd.f32 %v956, %v1052
  %v1054 = vpop.f32.mrb[0].mxu0
  %v1055 = vpop.f32.mrb[0].mxu0
  %v1056 = vadd.f32 %v959, %v1055
  %v1057 = vpop.f32.mrb[0].mxu0
  %1058 = vmatprep.mubr.bf16.mxu0 0
  %1059 = vmatmul.mubr.bf16.gmra.mrb[0].mxu0 %v871
  %v1060 = vpop.f32.mrb[0].mxu0
  %v1061 = vadd.f32 %v964, %v1060
  %v1062 = vpop.f32.mrb[0].mxu0
  %v1063 = vpop.f32.mrb[0].mxu0
  %v1064 = vadd.f32 %v967, %v1063
  %v1065 = vpop.f32.mrb[0].mxu0
  %1066 = vdwg.mxu0
  %v1067 = vsel %vm124, %v1005, 0.0
  %v1068 = vsel %vm124, %v1008, 0.0
  %v1069 = vadd.f32 %v1067, %v1068
  %v1070 = vsel %vm124, %v1013, 0.0
  %v1071 = vadd.f32 %v1069, %v1070
  %v1072 = vsel %vm124, %v1016, 0.0
  %v1073 = vadd.f32 %v1071, %v1072
  %v1074 = vsel %vm124, %v1021, 0.0
  %v1075 = vadd.f32 %v1073, %v1074
  %v1076 = vsel %vm124, %v1024, 0.0
  %v1077 = vadd.f32 %v1075, %v1076
  %v1078 = vsel %vm124, %v1029, 0.0
  %v1079 = vadd.f32 %v1077, %v1078
  %v1080 = vsel %vm124, %v1032, 0.0
  %v1081 = vadd.f32 %v1079, %v1080
  %v1082 = vsel %vm124, %v1037, 0.0
  %v1083 = vadd.f32 %v1081, %v1082
  %v1084 = vsel %vm124, %v1040, 0.0
  %v1085 = vadd.f32 %v1083, %v1084
  %v1086 = vsel %vm124, %v1045, 0.0
  %v1087 = vadd.f32 %v1085, %v1086
  %v1088 = vsel %vm124, %v1048, 0.0
  %v1089 = vadd.f32 %v1087, %v1088
  %v1090 = vsel %vm124, %v1053, 0.0
  %v1091 = vadd.f32 %v1089, %v1090
  %v1092 = vsel %vm124, %v1056, 0.0
  %v1093 = vadd.f32 %v1091, %v1092
  %v1094 = vsel %vm124, %v1061, 0.0
  %v1095 = vadd.f32 %v1093, %v1094
  %v1096 = vsel %vm124, %v1064, 0.0
  %v1097 = vadd.f32 %v1095, %v1096
  %v1098 = vrot.slane %v1097, 4
  %v1099 = vadd.f32 %v1097, %v1098
  %v1100 = vrot.slane %v1099, 2
  %v1101 = vadd.f32 %v1099, %v1100
  %v1102 = vrot.slane %v1101, 1
  %v1103 = vadd.f32 %v1101, %v1102
  %v1104 = vmul.f32 %v1103, 0.0078125
  %v1105 = vsub.f32 %v1005, %v1104
  %v1106 = vsub.f32 %v1008, %v1104
  %v1107 = vsub.f32 %v1013, %v1104
  %v1108 = vsub.f32 %v1016, %v1104
  %v1109 = vsub.f32 %v1021, %v1104
  %v1110 = vsub.f32 %v1024, %v1104
  %v1111 = vsub.f32 %v1029, %v1104
  %v1112 = vsub.f32 %v1032, %v1104
  %v1113 = vsub.f32 %v1037, %v1104
  %v1114 = vsub.f32 %v1040, %v1104
  %v1115 = vsub.f32 %v1045, %v1104
  %v1116 = vsub.f32 %v1048, %v1104
  %v1117 = vsub.f32 %v1053, %v1104
  %v1118 = vsub.f32 %v1056, %v1104
  %v1119 = vsub.f32 %v1061, %v1104
  %v1120 = vsub.f32 %v1064, %v1104
  %v1121 = vmul.f32 %v1105, %v1105
  %v1122 = vmul.f32 %v1106, %v1106
  %v1123 = vmul.f32 %v1107, %v1107
  %v1124 = vmul.f32 %v1108, %v1108
  %v1125 = vmul.f32 %v1109, %v1109
  %v1126 = vmul.f32 %v1110, %v1110
  %v1127 = vmul.f32 %v1111, %v1111
  %v1128 = vmul.f32 %v1112, %v1112
  %v1129 = vmul.f32 %v1113, %v1113
  %v1130 = vmul.f32 %v1114, %v1114
  %v1131 = vmul.f32 %v1115, %v1115
  %v1132 = vmul.f32 %v1116, %v1116
  %v1133 = vmul.f32 %v1117, %v1117
  %v1134 = vmul.f32 %v1118, %v1118
  %v1135 = vmul.f32 %v1119, %v1119
  %v1136 = vmul.f32 %v1120, %v1120
  %v1137 = vsel %vm124, %v1121, 0.0
  %v1138 = vsel %vm124, %v1122, 0.0
  %v1139 = vadd.f32 %v1137, %v1138
  %v1140 = vsel %vm124, %v1123, 0.0
  %v1141 = vadd.f32 %v1139, %v1140
  %v1142 = vsel %vm124, %v1124, 0.0
  %v1143 = vadd.f32 %v1141, %v1142
  %v1144 = vsel %vm124, %v1125, 0.0
  %v1145 = vadd.f32 %v1143, %v1144
  %v1146 = vsel %vm124, %v1126, 0.0
  %v1147 = vadd.f32 %v1145, %v1146
  %v1148 = vsel %vm124, %v1127, 0.0
  %v1149 = vadd.f32 %v1147, %v1148
  %v1150 = vsel %vm124, %v1128, 0.0
  %v1151 = vadd.f32 %v1149, %v1150
  %v1152 = vsel %vm124, %v1129, 0.0
  %v1153 = vadd.f32 %v1151, %v1152
  %v1154 = vsel %vm124, %v1130, 0.0
  %v1155 = vadd.f32 %v1153, %v1154
  %v1156 = vsel %vm124, %v1131, 0.0
  %v1157 = vadd.f32 %v1155, %v1156
  %v1158 = vsel %vm124, %v1132, 0.0
  %v1159 = vadd.f32 %v1157, %v1158
  %v1160 = vsel %vm124, %v1133, 0.0
  %v1161 = vadd.f32 %v1159, %v1160
  %v1162 = vsel %vm124, %v1134, 0.0
  %v1163 = vadd.f32 %v1161, %v1162
  %v1164 = vsel %vm124, %v1135, 0.0
  %v1165 = vadd.f32 %v1163, %v1164
  %v1166 = vsel %vm124, %v1136, 0.0
  %v1167 = vadd.f32 %v1165, %v1166
  %v1168 = vrot.slane %v1167, 4
  %v1169 = vadd.f32 %v1167, %v1168
  %v1170 = vrot.slane %v1169, 2
  %v1171 = vadd.f32 %v1169, %v1170
  %v1172 = vrot.slane %v1171, 1
  %v1173 = vadd.f32 %v1171, %v1172
  %v1174 = vmul.f32 %v1173, 0.0078125
  %v1175 = vadd.f32 %v1174, 1e-05
  %v1176 = vrsqrt.pop %v1175
  %v1177 = vmul.f32 %v123, %v1176
  %v1178 = vlaneseq
  %v1179 = vshrl.u32 %v1178, 7
  %v1180 = vsub.s32 0, %v1179
  %v1181 = vrot.slane %v1177, %v1180
  %v1182 = vmul.f32 %v1105, %v1181
  %v1183 = vmul.f32 %v1106, %v1181
  %v1184 = vmul.f32 %v1107, %v1181
  %v1185 = vmul.f32 %v1108, %v1181
  %v1186 = vmul.f32 %v1109, %v1181
  %v1187 = vmul.f32 %v1110, %v1181
  %v1188 = vmul.f32 %v1111, %v1181
  %v1189 = vmul.f32 %v1112, %v1181
  %v1190 = vmul.f32 %v1113, %v1181
  %v1191 = vmul.f32 %v1114, %v1181
  %v1192 = vmul.f32 %v1115, %v1181
  %v1193 = vmul.f32 %v1116, %v1181
  %v1194 = vmul.f32 %v1117, %v1181
  %v1195 = vmul.f32 %v1118, %v1181
  %v1196 = vmul.f32 %v1119, %v1181
  %v1197 = vmul.f32 %v1120, %v1181
  %v1198 = vlaneseq
  %v1199 = vshrl.u32 %v1198, 7
  %v1200 = vsub.s32 1, %v1199
  %v1201 = vrot.slane %v123, %v1200
  %v1202 = vadd.f32 %v1182, %v1201
  %v1203 = vadd.f32 %v1183, %v1201
  %v1204 = vadd.f32 %v1184, %v1201
  %v1205 = vadd.f32 %v1185, %v1201
  %v1206 = vadd.f32 %v1186, %v1201
  %v1207 = vadd.f32 %v1187, %v1201
  %v1208 = vadd.f32 %v1188, %v1201
  %v1209 = vadd.f32 %v1189, %v1201
  %v1210 = vadd.f32 %v1190, %v1201
  %v1211 = vadd.f32 %v1191, %v1201
  %v1212 = vadd.f32 %v1192, %v1201
  %v1213 = vadd.f32 %v1193, %v1201
  %v1214 = vadd.f32 %v1194, %v1201
  %v1215 = vadd.f32 %v1195, %v1201
  %v1216 = vadd.f32 %v1196, %v1201
  %v1217 = vadd.f32 %v1197, %v1201
  %v1218 = vmax.f32 %v1202, 0.0
  %v1219 = vmax.f32 %v1203, 0.0
  %v1220 = vmax.f32 %v1204, 0.0
  %v1221 = vmax.f32 %v1205, 0.0
  %v1222 = vmax.f32 %v1206, 0.0
  %v1223 = vmax.f32 %v1207, 0.0
  %v1224 = vmax.f32 %v1208, 0.0
  %v1225 = vmax.f32 %v1209, 0.0
  %v1226 = vmax.f32 %v1210, 0.0
  %v1227 = vmax.f32 %v1211, 0.0
  %v1228 = vmax.f32 %v1212, 0.0
  %v1229 = vmax.f32 %v1213, 0.0
  %v1230 = vmax.f32 %v1214, 0.0
  %v1231 = vmax.f32 %v1215, 0.0
  %v1232 = vmax.f32 %v1216, 0.0
  %v1233 = vmax.f32 %v1217, 0.0
  %1234 = vst.msk [vmem:[#allocation2 + $0x10] sm:$0xff] %vm124, %v1218
  %1235 = vst.msk [vmem:[#allocation2 + $0x18] sm:$0xff] %vm124, %v1219
  %1236 = vst.msk [vmem:[#allocation2 + $0x20] sm:$0xff] %vm124, %v1220
  %1237 = vst.msk [vmem:[#allocation2 + $0x28] sm:$0xff] %vm124, %v1221
  %1238 = vst.msk [vmem:[#allocation2 + $0x30] sm:$0xff] %vm124, %v1222
  %1239 = vst.msk [vmem:[#allocation2 + $0x38] sm:$0xff] %vm124, %v1223
  %1240 = vst.msk [vmem:[#allocation2 + $0x40] sm:$0xff] %vm124, %v1224
  %1241 = vst.msk [vmem:[#allocation2 + $0x48] sm:$0xff] %vm124, %v1225
  %1242 = vst.msk [vmem:[#allocation2 + $0x50] sm:$0xff] %vm124, %v1226
  %1243 = vst.msk [vmem:[#allocation2 + $0x58] sm:$0xff] %vm124, %v1227
  %1244 = vst.msk [vmem:[#allocation2 + $0x60] sm:$0xff] %vm124, %v1228
  %1245 = vst.msk [vmem:[#allocation2 + $0x68] sm:$0xff] %vm124, %v1229
  %1246 = vst.msk [vmem:[#allocation2 + $0x70] sm:$0xff] %vm124, %v1230
  %1247 = vst.msk [vmem:[#allocation2 + $0x78] sm:$0xff] %vm124, %v1231
  %1248 = vst.msk [vmem:[#allocation2 + $0x80] sm:$0xff] %vm124, %v1232
  %1249 = vst.msk [vmem:[#allocation2 + $0x88] sm:$0xff] %vm124, %v1233
  %s1250 = scalar_lea.vmem %s1, 144
  %v1251 = vld [vmem:[%s1250] sm:$0xf]
  %v1252 = vld [vmem:[%s1250 + $0x4] sm:$0xf]
  %v1253 = vld [vmem:[%s1250 + $0x8] sm:$0xf]
  %v1254 = vld [vmem:[%s1250 + $0xc] sm:$0xf]
  %v1255 = vld [vmem:[%s1250 + $0x10] sm:$0xf]
  %v1256 = vld [vmem:[%s1250 + $0x14] sm:$0xf]
  %v1257 = vld [vmem:[%s1250 + $0x18] sm:$0xf]
  %v1258 = vld [vmem:[%s1250 + $0x1c] sm:$0xf]
  %v1259 = vld [vmem:[%s1250 + $0x20] sm:$0xf]
  %v1260 = vld [vmem:[%s1250 + $0x24] sm:$0xf]
  %v1261 = vld [vmem:[%s1250 + $0x28] sm:$0xf]
  %v1262 = vld [vmem:[%s1250 + $0x2c] sm:$0xf]
  %v1263 = vld [vmem:[%s1250 + $0x30] sm:$0xf]
  %v1264 = vld [vmem:[%s1250 + $0x34] sm:$0xf]
  %v1265 = vld [vmem:[%s1250 + $0x38] sm:$0xf]
  %v1266 = vld [vmem:[%s1250 + $0x3c] sm:$0xf]
  %v1267 = vld [vmem:[%s1250 + $0x40] sm:$0xf]
  %v1268 = vld [vmem:[%s1250 + $0x44] sm:$0xf]
  %v1269 = vld [vmem:[%s1250 + $0x48] sm:$0xf]
  %v1270 = vld [vmem:[%s1250 + $0x4c] sm:$0xf]
  %v1271 = vld [vmem:[%s1250 + $0x50] sm:$0xf]
  %v1272 = vld [vmem:[%s1250 + $0x54] sm:$0xf]
  %v1273 = vld [vmem:[%s1250 + $0x58] sm:$0xf]
  %v1274 = vld [vmem:[%s1250 + $0x5c] sm:$0xf]
  %v1275 = vld [vmem:[%s1250 + $0x60] sm:$0xf]
  %v1276 = vld [vmem:[%s1250 + $0x64] sm:$0xf]
  %v1277 = vld [vmem:[%s1250 + $0x68] sm:$0xf]
  %v1278 = vld [vmem:[%s1250 + $0x6c] sm:$0xf]
  %v1279 = vld [vmem:[%s1250 + $0x70] sm:$0xf]
  %v1280 = vld [vmem:[%s1250 + $0x74] sm:$0xf]
  %v1281 = vld [vmem:[%s1250 + $0x78] sm:$0xf]
  %v1282 = vld [vmem:[%s1250 + $0x7c] sm:$0xf]
  %v1283 = vld [vmem:[%s1250 + $0x80] sm:$0xf]
  %v1284 = vld [vmem:[%s1250 + $0x84] sm:$0xf]
  %v1285 = vld [vmem:[%s1250 + $0x88] sm:$0xf]
  %v1286 = vld [vmem:[%s1250 + $0x8c] sm:$0xf]
  %v1287 = vld [vmem:[#allocation2 + $0x7] sm:$0xff]
  %v1288 = vld [vmem:[#allocation2 + $0xf] sm:$0xff]
  %v1289 = vld [vmem:[#allocation2 + $0x17] sm:$0xff]
  %v1290 = vld [vmem:[#allocation2 + $0x1f] sm:$0xff]
  %v1291 = vld [vmem:[#allocation2 + $0x27] sm:$0xff]
  %v1292 = vld [vmem:[#allocation2 + $0x2f] sm:$0xff]
  %v1293 = vld [vmem:[#allocation2 + $0x37] sm:$0xff]
  %v1294 = vld [vmem:[#allocation2 + $0x3f] sm:$0xff]
  %v1295 = vld [vmem:[#allocation2 + $0x47] sm:$0xff]
  %v1296 = vld [vmem:[#allocation2 + $0x4f] sm:$0xff]
  %v1297 = vld [vmem:[#allocation2 + $0x57] sm:$0xff]
  %v1298 = vld [vmem:[#allocation2 + $0x5f] sm:$0xff]
  %v1299 = vld [vmem:[#allocation2 + $0x67] sm:$0xff]
  %v1300 = vld [vmem:[#allocation2 + $0x6f] sm:$0xff]
  %v1301 = vld [vmem:[#allocation2 + $0x77] sm:$0xff]
  %v1302 = vld [vmem:[#allocation2 + $0x7f] sm:$0xff]
  %v1303 = vld [vmem:[#allocation2 + $0x8] sm:$0xff]
  %v1304 = vld [vmem:[#allocation2 + $0x10] sm:$0xff]
  %v1305 = vld [vmem:[#allocation2 + $0x18] sm:$0xff]
  %v1306 = vld [vmem:[#allocation2 + $0x20] sm:$0xff]
  %v1307 = vld [vmem:[#allocation2 + $0x28] sm:$0xff]
  %v1308 = vld [vmem:[#allocation2 + $0x30] sm:$0xff]
  %v1309 = vld [vmem:[#allocation2 + $0x38] sm:$0xff]
  %v1310 = vld [vmem:[#allocation2 + $0x40] sm:$0xff]
  %v1311 = vld [vmem:[#allocation2 + $0x48] sm:$0xff]
  %v1312 = vld [vmem:[#allocation2 + $0x50] sm:$0xff]
  %v1313 = vld [vmem:[#allocation2 + $0x58] sm:$0xff]
  %v1314 = vld [vmem:[#allocation2 + $0x60] sm:$0xff]
  %v1315 = vld [vmem:[#allocation2 + $0x68] sm:$0xff]
  %v1316 = vld [vmem:[#allocation2 + $0x70] sm:$0xff]
  %v1317 = vld [vmem:[#allocation2 + $0x78] sm:$0xff]
  %v1318 = vld [vmem:[#allocation2 + $0x80] sm:$0xff]
  %v1319 = vld [vmem:[#allocation2 + $0x9] sm:$0xff]
  %v1320 = vld [vmem:[#allocation2 + $0x11] sm:$0xff]
  %v1321 = vld [vmem:[#allocation2 + $0x19] sm:$0xff]
  %v1322 = vld [vmem:[#allocation2 + $0x21] sm:$0xff]
  %v1323 = vld [vmem:[#allocation2 + $0x29] sm:$0xff]
  %v1324 = vld [vmem:[#allocation2 + $0x31] sm:$0xff]
  %v1325 = vld [vmem:[#allocation2 + $0x39] sm:$0xff]
  %v1326 = vld [vmem:[#allocation2 + $0x41] sm:$0xff]
  %v1327 = vld [vmem:[#allocation2 + $0x49] sm:$0xff]
  %v1328 = vld [vmem:[#allocation2 + $0x51] sm:$0xff]
  %v1329 = vld [vmem:[#allocation2 + $0x59] sm:$0xff]
  %v1330 = vld [vmem:[#allocation2 + $0x61] sm:$0xff]
  %v1331 = vld [vmem:[#allocation2 + $0x69] sm:$0xff]
  %v1332 = vld [vmem:[#allocation2 + $0x71] sm:$0xff]
  %v1333 = vld [vmem:[#allocation2 + $0x79] sm:$0xff]
  %v1334 = vld [vmem:[#allocation2 + $0x81] sm:$0xff]
  %v1335 = vld [vmem:[#allocation2 + $0x87] sm:$0xff]
  %v1336 = vld [vmem:[#allocation2 + $0x88] sm:$0xff]
  %v1337 = vld [vmem:[#allocation2 + $0x89] sm:$0xff]
  %v1338 = vld [vmem:[#allocation2 + $0x8f] sm:$0xff]
  %v1339 = vld [vmem:[#allocation2 + $0x90] sm:$0xff]
  %v1340 = vld [vmem:[#allocation2 + $0x91] sm:$0xff]
  %1357 = vrot.lane.b32.xlu0 %v1303, 32
  %v1358 = vpop.permute.xlu0 %1357
  %1359 = vrot.lane.b32.xlu0 %v1304, 32
  %v1360 = vpop.permute.xlu0 %1359
  %1361 = vrot.lane.b32.xlu0 %v1305, 32
  %v1362 = vpop.permute.xlu0 %1361
  %1363 = vrot.lane.b32.xlu0 %v1306, 32
  %v1364 = vpop.permute.xlu0 %1363
  %1365 = vrot.lane.b32.xlu0 %v1307, 32
  %v1366 = vpop.permute.xlu0 %1365
  %1367 = vrot.lane.b32.xlu0 %v1308, 32
  %v1368 = vpop.permute.xlu0 %1367
  %1369 = vrot.lane.b32.xlu0 %v1309, 32
  %v1370 = vpop.permute.xlu0 %1369
  %1371 = vrot.lane.b32.xlu0 %v1310, 32
  %v1372 = vpop.permute.xlu0 %1371
  %1373 = vrot.lane.b32.xlu0 %v1311, 32
  %v1374 = vpop.permute.xlu0 %1373
  %1375 = vrot.lane.b32.xlu0 %v1312, 32
  %v1376 = vpop.permute.xlu0 %1375
  %1377 = vrot.lane.b32.xlu0 %v1313, 32
  %v1378 = vpop.permute.xlu0 %1377
  %1379 = vrot.lane.b32.xlu0 %v1314, 32
  %v1380 = vpop.permute.xlu0 %1379
  %1381 = vrot.lane.b32.xlu0 %v1315, 32
  %v1382 = vpop.permute.xlu0 %1381
  %1383 = vrot.lane.b32.xlu0 %v1316, 32
  %v1384 = vpop.permute.xlu0 %1383
  %1385 = vrot.lane.b32.xlu0 %v1317, 32
  %v1386 = vpop.permute.xlu0 %1385
  %1387 = vrot.lane.b32.xlu0 %v1318, 32
  %v1388 = vpop.permute.xlu0 %1387
  %1421 = vrot.lane.b32.xlu0 %v1319, 64
  %v1422 = vpop.permute.xlu0 %1421
  %1423 = vrot.lane.b32.xlu0 %v1320, 64
  %v1424 = vpop.permute.xlu0 %1423
  %1425 = vrot.lane.b32.xlu0 %v1321, 64
  %v1426 = vpop.permute.xlu0 %1425
  %1427 = vrot.lane.b32.xlu0 %v1322, 64
  %v1428 = vpop.permute.xlu0 %1427
  %1429 = vrot.lane.b32.xlu0 %v1323, 64
  %v1430 = vpop.permute.xlu0 %1429
  %1431 = vrot.lane.b32.xlu0 %v1324, 64
  %v1432 = vpop.permute.xlu0 %1431
  %1433 = vrot.lane.b32.xlu0 %v1325, 64
  %v1434 = vpop.permute.xlu0 %1433
  %1435 = vrot.lane.b32.xlu0 %v1326, 64
  %v1436 = vpop.permute.xlu0 %1435
  %1437 = vrot.lane.b32.xlu0 %v1327, 64
  %v1438 = vpop.permute.xlu0 %1437
  %1439 = vrot.lane.b32.xlu0 %v1328, 64
  %v1440 = vpop.permute.xlu0 %1439
  %1441 = vrot.lane.b32.xlu0 %v1329, 64
  %v1442 = vpop.permute.xlu0 %1441
  %1443 = vrot.lane.b32.xlu0 %v1330, 64
  %v1444 = vpop.permute.xlu0 %1443
  %1445 = vrot.lane.b32.xlu0 %v1331, 64
  %v1446 = vpop.permute.xlu0 %1445
  %1447 = vrot.lane.b32.xlu0 %v1332, 64
  %v1448 = vpop.permute.xlu0 %1447
  %1449 = vrot.lane.b32.xlu0 %v1333, 64
  %v1450 = vpop.permute.xlu0 %1449
  %1451 = vrot.lane.b32.xlu0 %v1334, 64
  %v1452 = vpop.permute.xlu0 %1451
  %1485 = vrot.lane.b32.xlu0 %v1288, 96
  %v1486 = vpop.permute.xlu0 %1485
  %1487 = vrot.lane.b32.xlu0 %v1289, 96
  %v1488 = vpop.permute.xlu0 %1487
  %1489 = vrot.lane.b32.xlu0 %v1290, 96
  %v1490 = vpop.permute.xlu0 %1489
  %1491 = vrot.lane.b32.xlu0 %v1291, 96
  %v1492 = vpop.permute.xlu0 %1491
  %1493 = vrot.lane.b32.xlu0 %v1292, 96
  %v1494 = vpop.permute.xlu0 %1493
  %1495 = vrot.lane.b32.xlu0 %v1293, 96
  %v1496 = vpop.permute.xlu0 %1495
  %1497 = vrot.lane.b32.xlu0 %v1294, 96
  %v1498 = vpop.permute.xlu0 %1497
  %1499 = vrot.lane.b32.xlu0 %v1295, 96
  %v1500 = vpop.permute.xlu0 %1499
  %1501 = vrot.lane.b32.xlu0 %v1296, 96
  %v1502 = vpop.permute.xlu0 %1501
  %1503 = vrot.lane.b32.xlu0 %v1297, 96
  %v1504 = vpop.permute.xlu0 %1503
  %1505 = vrot.lane.b32.xlu0 %v1298, 96
  %v1506 = vpop.permute.xlu0 %1505
  %1507 = vrot.lane.b32.xlu0 %v1299, 96
  %v1508 = vpop.permute.xlu0 %1507
  %1509 = vrot.lane.b32.xlu0 %v1300, 96
  %v1510 = vpop.permute.xlu0 %1509
  %1511 = vrot.lane.b32.xlu0 %v1301, 96
  %v1512 = vpop.permute.xlu0 %1511
  %1513 = vrot.lane.b32.xlu0 %v1302, 96
  %v1514 = vpop.permute.xlu0 %1513
  %1515 = vrot.lane.b32.xlu0 %v1335, 96
  %v1516 = vpop.permute.xlu0 %1515
  %1534 = vrot.lane.b32.xlu0 %v1320, 32
  %v1535 = vpop.permute.xlu0 %1534
  %1536 = vrot.lane.b32.xlu0 %v1321, 32
  %v1537 = vpop.permute.xlu0 %1536
  %1538 = vrot.lane.b32.xlu0 %v1322, 32
  %v1539 = vpop.permute.xlu0 %1538
  %1540 = vrot.lane.b32.xlu0 %v1323, 32
  %v1541 = vpop.permute.xlu0 %1540
  %1542 = vrot.lane.b32.xlu0 %v1324, 32
  %v1543 = vpop.permute.xlu0 %1542
  %1544 = vrot.lane.b32.xlu0 %v1325, 32
  %v1545 = vpop.permute.xlu0 %1544
  %1546 = vrot.lane.b32.xlu0 %v1326, 32
  %v1547 = vpop.permute.xlu0 %1546
  %1548 = vrot.lane.b32.xlu0 %v1327, 32
  %v1549 = vpop.permute.xlu0 %1548
  %1550 = vrot.lane.b32.xlu0 %v1328, 32
  %v1551 = vpop.permute.xlu0 %1550
  %1552 = vrot.lane.b32.xlu0 %v1329, 32
  %v1553 = vpop.permute.xlu0 %1552
  %1554 = vrot.lane.b32.xlu0 %v1330, 32
  %v1555 = vpop.permute.xlu0 %1554
  %1556 = vrot.lane.b32.xlu0 %v1331, 32
  %v1557 = vpop.permute.xlu0 %1556
  %1558 = vrot.lane.b32.xlu0 %v1332, 32
  %v1559 = vpop.permute.xlu0 %1558
  %1560 = vrot.lane.b32.xlu0 %v1333, 32
  %v1561 = vpop.permute.xlu0 %1560
  %1562 = vrot.lane.b32.xlu0 %v1334, 32
  %v1563 = vpop.permute.xlu0 %1562
  %1564 = vrot.lane.b32.xlu0 %v1337, 32
  %v1565 = vpop.permute.xlu0 %1564
  %1583 = vrot.lane.b32.xlu0 %v1289, 64
  %v1584 = vpop.permute.xlu0 %1583
  %1585 = vrot.lane.b32.xlu0 %v1290, 64
  %v1586 = vpop.permute.xlu0 %1585
  %1587 = vrot.lane.b32.xlu0 %v1291, 64
  %v1588 = vpop.permute.xlu0 %1587
  %1589 = vrot.lane.b32.xlu0 %v1292, 64
  %v1590 = vpop.permute.xlu0 %1589
  %1591 = vrot.lane.b32.xlu0 %v1293, 64
  %v1592 = vpop.permute.xlu0 %1591
  %1593 = vrot.lane.b32.xlu0 %v1294, 64
  %v1594 = vpop.permute.xlu0 %1593
  %1595 = vrot.lane.b32.xlu0 %v1295, 64
  %v1596 = vpop.permute.xlu0 %1595
  %1597 = vrot.lane.b32.xlu0 %v1296, 64
  %v1598 = vpop.permute.xlu0 %1597
  %1599 = vrot.lane.b32.xlu0 %v1297, 64
  %v1600 = vpop.permute.xlu0 %1599
  %1601 = vrot.lane.b32.xlu0 %v1298, 64
  %v1602 = vpop.permute.xlu0 %1601
  %1603 = vrot.lane.b32.xlu0 %v1299, 64
  %v1604 = vpop.permute.xlu0 %1603
  %1605 = vrot.lane.b32.xlu0 %v1300, 64
  %v1606 = vpop.permute.xlu0 %1605
  %1607 = vrot.lane.b32.xlu0 %v1301, 64
  %v1608 = vpop.permute.xlu0 %1607
  %1609 = vrot.lane.b32.xlu0 %v1302, 64
  %v1610 = vpop.permute.xlu0 %1609
  %1611 = vrot.lane.b32.xlu0 %v1335, 64
  %v1612 = vpop.permute.xlu0 %1611
  %1613 = vrot.lane.b32.xlu0 %v1338, 64
  %v1614 = vpop.permute.xlu0 %1613
  %1633 = vrot.lane.b32.xlu0 %v1305, 96
  %v1634 = vpop.permute.xlu0 %1633
  %1635 = vrot.lane.b32.xlu0 %v1306, 96
  %v1636 = vpop.permute.xlu0 %1635
  %1637 = vrot.lane.b32.xlu0 %v1307, 96
  %v1638 = vpop.permute.xlu0 %1637
  %1639 = vrot.lane.b32.xlu0 %v1308, 96
  %v1640 = vpop.permute.xlu0 %1639
  %1641 = vrot.lane.b32.xlu0 %v1309, 96
  %v1642 = vpop.permute.xlu0 %1641
  %1643 = vrot.lane.b32.xlu0 %v1310, 96
  %v1644 = vpop.permute.xlu0 %1643
  %1645 = vrot.lane.b32.xlu0 %v1311, 96
  %v1646 = vpop.permute.xlu0 %1645
  %1647 = vrot.lane.b32.xlu0 %v1312, 96
  %v1648 = vpop.permute.xlu0 %1647
  %1649 = vrot.lane.b32.xlu0 %v1313, 96
  %v1650 = vpop.permute.xlu0 %1649
  %1651 = vrot.lane.b32.xlu0 %v1314, 96
  %v1652 = vpop.permute.xlu0 %1651
  %1653 = vrot.lane.b32.xlu0 %v1315, 96
  %v1654 = vpop.permute.xlu0 %1653
  %1655 = vrot.lane.b32.xlu0 %v1316, 96
  %v1656 = vpop.permute.xlu0 %1655
  %1657 = vrot.lane.b32.xlu0 %v1317, 96
  %v1658 = vpop.permute.xlu0 %1657
  %1659 = vrot.lane.b32.xlu0 %v1318, 96
  %v1660 = vpop.permute.xlu0 %1659
  %1661 = vrot.lane.b32.xlu0 %v1336, 96
  %v1662 = vpop.permute.xlu0 %1661
  %1663 = vrot.lane.b32.xlu0 %v1339, 96
  %v1664 = vpop.permute.xlu0 %1663
  %v1681 = vsel %vm124, %v1287, %v1358
  %v1682 = vsel %vm124, %v1288, %v1360
  %v1683 = vsel %vm124, %v1289, %v1362
  %v1684 = vsel %vm124, %v1290, %v1364
  %v1685 = vsel %vm124, %v1291, %v1366
  %v1686 = vsel %vm124, %v1292, %v1368
  %v1687 = vsel %vm124, %v1293, %v1370
  %v1688 = vsel %vm124, %v1294, %v1372
  %v1689 = vsel %vm124, %v1295, %v1374
  %v1690 = vsel %vm124, %v1296, %v1376
  %v1691 = vsel %vm124, %v1297, %v1378
  %v1692 = vsel %vm124, %v1298, %v1380
  %v1693 = vsel %vm124, %v1299, %v1382
  %v1694 = vsel %vm124, %v1300, %v1384
  %v1695 = vsel %vm124, %v1301, %v1386
  %v1696 = vsel %vm124, %v1302, %v1388
  %v1697 = vsel %vm587, %v1681, %v1422
  %v1698 = vsel %vm587, %v1682, %v1424
  %v1699 = vsel %vm587, %v1683, %v1426
  %v1700 = vsel %vm587, %v1684, %v1428
  %v1701 = vsel %vm587, %v1685, %v1430
  %v1702 = vsel %vm587, %v1686, %v1432
  %v1703 = vsel %vm587, %v1687, %v1434
  %v1704 = vsel %vm587, %v1688, %v1436
  %v1705 = vsel %vm587, %v1689, %v1438
  %v1706 = vsel %vm587, %v1690, %v1440
  %v1707 = vsel %vm587, %v1691, %v1442
  %v1708 = vsel %vm587, %v1692, %v1444
  %v1709 = vsel %vm587, %v1693, %v1446
  %v1710 = vsel %vm587, %v1694, %v1448
  %v1711 = vsel %vm587, %v1695, %v1450
  %v1712 = vsel %vm587, %v1696, %v1452
  %v1713 = vsel %vm604, %v1697, %v1486
  %v1714 = vsel %vm604, %v1698, %v1488
  %v1715 = vsel %vm604, %v1699, %v1490
  %v1716 = vsel %vm604, %v1700, %v1492
  %v1717 = vsel %vm604, %v1701, %v1494
  %v1718 = vsel %vm604, %v1702, %v1496
  %v1719 = vsel %vm604, %v1703, %v1498
  %v1720 = vsel %vm604, %v1704, %v1500
  %v1721 = vsel %vm604, %v1705, %v1502
  %v1722 = vsel %vm604, %v1706, %v1504
  %v1723 = vsel %vm604, %v1707, %v1506
  %v1724 = vsel %vm604, %v1708, %v1508
  %v1725 = vsel %vm604, %v1709, %v1510
  %v1726 = vsel %vm604, %v1710, %v1512
  %v1727 = vsel %vm604, %v1711, %v1514
  %v1728 = vsel %vm604, %v1712, %v1516
  %v1729 = vsel %vm124, %v1304, %v1535
  %v1730 = vsel %vm124, %v1305, %v1537
  %v1731 = vsel %vm124, %v1306, %v1539
  %v1732 = vsel %vm124, %v1307, %v1541
  %v1733 = vsel %vm124, %v1308, %v1543
  %v1734 = vsel %vm124, %v1309, %v1545
  %v1735 = vsel %vm124, %v1310, %v1547
  %v1736 = vsel %vm124, %v1311, %v1549
  %v1737 = vsel %vm124, %v1312, %v1551
  %v1738 = vsel %vm124, %v1313, %v1553
  %v1739 = vsel %vm124, %v1314, %v1555
  %v1740 = vsel %vm124, %v1315, %v1557
  %v1741 = vsel %vm124, %v1316, %v1559
  %v1742 = vsel %vm124, %v1317, %v1561
  %v1743 = vsel %vm124, %v1318, %v1563
  %v1744 = vsel %vm124, %v1336, %v1565
  %v1745 = vsel %vm587, %v1729, %v1584
  %v1746 = vsel %vm587, %v1730, %v1586
  %v1747 = vsel %vm587, %v1731, %v1588
  %v1748 = vsel %vm587, %v1732, %v1590
  %v1749 = vsel %vm587, %v1733, %v1592
  %v1750 = vsel %vm587, %v1734, %v1594
  %v1751 = vsel %vm587, %v1735, %v1596
  %v1752 = vsel %vm587, %v1736, %v1598
  %v1753 = vsel %vm587, %v1737, %v1600
  %v1754 = vsel %vm587, %v1738, %v1602
  %v1755 = vsel %vm587, %v1739, %v1604
  %v1756 = vsel %vm587, %v1740, %v1606
  %v1757 = vsel %vm587, %v1741, %v1608
  %v1758 = vsel %vm587, %v1742, %v1610
  %v1759 = vsel %vm587, %v1743, %v1612
  %v1760 = vsel %vm587, %v1744, %v1614
  %v1761 = vsel %vm604, %v1745, %v1634
  %v1762 = vsel %vm604, %v1746, %v1636
  %v1763 = vsel %vm604, %v1747, %v1638
  %v1764 = vsel %vm604, %v1748, %v1640
  %v1765 = vsel %vm604, %v1749, %v1642
  %v1766 = vsel %vm604, %v1750, %v1644
  %v1767 = vsel %vm604, %v1751, %v1646
  %v1768 = vsel %vm604, %v1752, %v1648
  %v1769 = vsel %vm604, %v1753, %v1650
  %v1770 = vsel %vm604, %v1754, %v1652
  %v1771 = vsel %vm604, %v1755, %v1654
  %v1772 = vsel %vm604, %v1756, %v1656
  %v1773 = vsel %vm604, %v1757, %v1658
  %v1774 = vsel %vm604, %v1758, %v1660
  %v1775 = vsel %vm604, %v1759, %v1662
  %v1776 = vsel %vm604, %v1760, %v1664
  %v1777 = vmul.f32 %v1713, %v75
  %v1778 = vmul.f32 %v1761, %v76
  %v1779 = vmul.f32 %v1321, %v77
  %v1780 = vmul.f32 %v1714, %v78
  %v1781 = vmul.f32 %v1762, %v79
  %v1782 = vmul.f32 %v1322, %v80
  %v1783 = vmul.f32 %v1715, %v81
  %v1784 = vmul.f32 %v1763, %v82
  %v1785 = vmul.f32 %v1323, %v83
  %v1786 = vmul.f32 %v1716, %v84
  %v1787 = vmul.f32 %v1764, %v85
  %v1788 = vmul.f32 %v1324, %v86
  %v1789 = vmul.f32 %v1717, %v87
  %v1790 = vmul.f32 %v1765, %v88
  %v1791 = vmul.f32 %v1325, %v89
  %v1792 = vmul.f32 %v1718, %v90
  %v1793 = vmul.f32 %v1766, %v91
  %v1794 = vmul.f32 %v1326, %v92
  %v1795 = vmul.f32 %v1719, %v93
  %v1796 = vmul.f32 %v1767, %v94
  %v1797 = vmul.f32 %v1327, %v95
  %v1798 = vmul.f32 %v1720, %v96
  %v1799 = vmul.f32 %v1768, %v97
  %v1800 = vmul.f32 %v1328, %v98
  %v1801 = vmul.f32 %v1721, %v99
  %v1802 = vmul.f32 %v1769, %v100
  %v1803 = vmul.f32 %v1329, %v101
  %v1804 = vmul.f32 %v1722, %v102
  %v1805 = vmul.f32 %v1770, %v103
  %v1806 = vmul.f32 %v1330, %v104
  %v1807 = vmul.f32 %v1723, %v105
  %v1808 = vmul.f32 %v1771, %v106
  %v1809 = vmul.f32 %v1331, %v107
  %v1810 = vmul.f32 %v1724, %v108
  %v1811 = vmul.f32 %v1772, %v109
  %v1812 = vmul.f32 %v1332, %v110
  %v1813 = vmul.f32 %v1725, %v111
  %v1814 = vmul.f32 %v1773, %v112
  %v1815 = vmul.f32 %v1333, %v113
  %v1816 = vmul.f32 %v1726, %v114
  %v1817 = vmul.f32 %v1774, %v115
  %v1818 = vmul.f32 %v1334, %v116
  %v1819 = vmul.f32 %v1727, %v117
  %v1820 = vmul.f32 %v1775, %v118
  %v1821 = vmul.f32 %v1337, %v119
  %v1822 = vmul.f32 %v1728, %v120
  %v1823 = vmul.f32 %v1776, %v121
  %v1824 = vmul.f32 %v1340, %v122
  %v1825 = vpack.c.bf16 %v1780, %v1777
  %v1826 = vpack.c.bf16 %v1781, %v1778
  %v1827 = vpack.c.bf16 %v1782, %v1779
  %v1828 = vpack.c.bf16 %v1786, %v1783
  %v1829 = vpack.c.bf16 %v1787, %v1784
  %v1830 = vpack.c.bf16 %v1788, %v1785
  %v1831 = vpack.c.bf16 %v1792, %v1789
  %v1832 = vpack.c.bf16 %v1793, %v1790
  %v1833 = vpack.c.bf16 %v1794, %v1791
  %v1834 = vpack.c.bf16 %v1798, %v1795
  %v1835 = vpack.c.bf16 %v1799, %v1796
  %v1836 = vpack.c.bf16 %v1800, %v1797
  %v1837 = vpack.c.bf16 %v1804, %v1801
  %v1838 = vpack.c.bf16 %v1805, %v1802
  %v1839 = vpack.c.bf16 %v1806, %v1803
  %v1840 = vpack.c.bf16 %v1810, %v1807
  %v1841 = vpack.c.bf16 %v1811, %v1808
  %v1842 = vpack.c.bf16 %v1812, %v1809
  %v1843 = vpack.c.bf16 %v1816, %v1813
  %v1844 = vpack.c.bf16 %v1817, %v1814
  %v1845 = vpack.c.bf16 %v1818, %v1815
  %v1846 = vpack.c.bf16 %v1822, %v1819
  %v1847 = vpack.c.bf16 %v1823, %v1820
  %v1848 = vpack.c.bf16 %v1824, %v1821
  %v1885 = vunpack.c.l.b16 %v1251
  %v1886 = vunpack.c.l.b16 %v1252
  %v1887 = vunpack.c.l.b16 %v1253
  %v1888 = vunpack.c.l.b16 %v1254
  %v1889 = vunpack.c.l.b16 %v1255
  %v1890 = vunpack.c.l.b16 %v1256
  %v1891 = vunpack.c.l.b16 %v1257
  %v1892 = vunpack.c.l.b16 %v1258
  %v1893 = vunpack.c.l.b16 %v1259
  %v1894 = vunpack.c.l.b16 %v1260
  %v1895 = vunpack.c.l.b16 %v1261
  %v1896 = vunpack.c.l.b16 %v1262
  %v1897 = vunpack.c.l.b16 %v1263
  %v1898 = vunpack.c.l.b16 %v1264
  %v1899 = vunpack.c.l.b16 %v1265
  %v1900 = vunpack.c.l.b16 %v1266
  %v1901 = vunpack.c.l.b16 %v1267
  %v1902 = vunpack.c.l.b16 %v1268
  %v1903 = vunpack.c.l.b16 %v1269
  %v1904 = vunpack.c.l.b16 %v1270
  %v1905 = vunpack.c.l.b16 %v1271
  %v1906 = vunpack.c.l.b16 %v1272
  %v1907 = vunpack.c.l.b16 %v1273
  %v1908 = vunpack.c.l.b16 %v1274
  %v1909 = vunpack.c.l.b16 %v1275
  %v1910 = vunpack.c.l.b16 %v1276
  %v1911 = vunpack.c.l.b16 %v1277
  %v1912 = vunpack.c.l.b16 %v1278
  %v1913 = vunpack.c.l.b16 %v1279
  %v1914 = vunpack.c.l.b16 %v1280
  %v1915 = vunpack.c.l.b16 %v1281
  %v1916 = vunpack.c.l.b16 %v1282
  %v1917 = vunpack.c.l.b16 %v1283
  %v1918 = vunpack.c.l.b16 %v1284
  %v1919 = vunpack.c.l.b16 %v1285
  %v1920 = vunpack.c.l.b16 %v1286
  %v1921 = vpack.c.b16 %v1886, %v1885
  %v1922 = vpack.c.b16 %v1888, %v1887
  %v1923 = vpack.c.b16 %v1890, %v1889
  %v1924 = vpack.c.b16 %v1892, %v1891
  %v1925 = vpack.c.b16 %v1894, %v1893
  %v1926 = vpack.c.b16 %v1896, %v1895
  %v1927 = vpack.c.b16 %v1898, %v1897
  %v1928 = vpack.c.b16 %v1900, %v1899
  %v1929 = vpack.c.b16 %v1902, %v1901
  %v1930 = vpack.c.b16 %v1904, %v1903
  %v1931 = vpack.c.b16 %v1906, %v1905
  %v1932 = vpack.c.b16 %v1908, %v1907
  %v1933 = vpack.c.b16 %v1910, %v1909
  %v1934 = vpack.c.b16 %v1912, %v1911
  %v1935 = vpack.c.b16 %v1914, %v1913
  %v1936 = vpack.c.b16 %v1916, %v1915
  %v1937 = vpack.c.b16 %v1918, %v1917
  %v1938 = vpack.c.b16 %v1920, %v1919
  %v1958 = vsel %vm124, %v1827, 0
  %v1961 = vsel %vm124, %v1830, 0
  %v1964 = vsel %vm124, %v1833, 0
  %v1967 = vsel %vm124, %v1836, 0
  %v1970 = vsel %vm124, %v1839, 0
  %v1973 = vsel %vm124, %v1842, 0
  %v1976 = vsel %vm124, %v1845, 0
  %v1979 = vsel %vm124, %v1848, 0
  %1981 = vmatprep.subr.bf16.mxu0 0
  %1982 = vmatpush1.bf16.msra.mxu0 %v1921
  %1983 = vmatprep.subr.bf16.mxu0 0
  %1984 = vmatpush1.bf16.msra.mxu0 %v1922
  %1985 = vmatprep.subr.bf16.mxu0 0
  %1986 = vmatpush1.bf16.msra.mxu0 %v1923
  %1987 = vmatprep.subr.bf16.mxu0 0
  %1988 = vmatpush1.bf16.msra.mxu0 %v1924
  %1989 = vmatprep.subr.bf16.mxu0 0
  %1990 = vmatpush1.bf16.msra.mxu0 %v1925
  %1991 = vmatprep.subr.bf16.mxu0 0
  %1992 = vmatpush1.bf16.msra.mxu0 %v1926
  %1993 = vmatprep.subr.bf16.mxu0 0
  %1994 = vmatpush1.bf16.msra.mxu0 %v1927
  %1995 = vmatprep.subr.bf16.mxu0 0
  %1996 = vmatpush1.bf16.msra.mxu0 %v1928
  %1997 = vmatprep.subr.bf16.mxu0 0
  %1998 = vmatpush1.bf16.msra.mxu0 %v1929
  %1999 = vmatprep.subr.bf16.mxu0 0
  %2000 = vmatpush1.bf16.msra.mxu0 %v1930
  %2001 = vmatprep.subr.bf16.mxu0 0
  %2002 = vmatpush1.bf16.msra.mxu0 %v1931
  %2003 = vmatprep.subr.bf16.mxu0 0
  %2004 = vmatpush1.bf16.msra.mxu0 %v1932
  %2005 = vmatprep.subr.bf16.mxu0 0
  %2006 = vmatpush1.bf16.msra.mxu0 %v1933
  %2007 = vmatprep.subr.bf16.mxu0 0
  %2008 = vmatpush1.bf16.msra.mxu0 %v1934
  %2009 = vmatprep.subr.bf16.mxu0 0
  %2010 = vmatpush1.bf16.msra.mxu0 %v1935
  %2011 = vmatprep.subr.bf16.mxu0 0
  %2012 = vmatpush1.bf16.msra.mxu0 %v1936
  %2013 = vmatprep.mubr.bf16.mxu0 %v1826
  %2014 = vmatmul.mubr.bf16.gmra.mrb[0].mxu0 %v1825
  %v2015 = vpop.f32.mrb[0].mxu0
  %v2016 = vadd.f32 0.0, %v2015
  %v2017 = vpop.f32.mrb[0].mxu0
  %v2018 = vpop.f32.mrb[0].mxu0
  %v2019 = vadd.f32 0.0, %v2018
  %v2020 = vpop.f32.mrb[0].mxu0
  %2021 = vmatprep.mubr.bf16.mxu0 %v1829
  %2022 = vmatmul.mubr.bf16.gmra.mrb[0].mxu0 %v1828
  %v2023 = vpop.f32.mrb[0].mxu0
  %v2024 = vadd.f32 0.0, %v2023
  %v2025 = vpop.f32.mrb[0].mxu0
  %v2026 = vpop.f32.mrb[0].mxu0
  %v2027 = vadd.f32 0.0, %v2026
  %v2028 = vpop.f32.mrb[0].mxu0
  %2029 = vmatprep.mubr.bf16.mxu0 %v1832
  %2030 = vmatmul.mubr.bf16.gmra.mrb[0].mxu0 %v1831
  %v2031 = vpop.f32.mrb[0].mxu0
  %v2032 = vadd.f32 0.0, %v2031
  %v2033 = vpop.f32.mrb[0].mxu0
  %v2034 = vpop.f32.mrb[0].mxu0
  %v2035 = vadd.f32 0.0, %v2034
  %v2036 = vpop.f32.mrb[0].mxu0
  %2037 = vmatprep.mubr.bf16.mxu0 %v1835
  %2038 = vmatmul.mubr.bf16.gmra.mrb[0].mxu0 %v1834
  %v2039 = vpop.f32.mrb[0].mxu0
  %v2040 = vadd.f32 0.0, %v2039
  %v2041 = vpop.f32.mrb[0].mxu0
  %v2042 = vpop.f32.mrb[0].mxu0
  %v2043 = vadd.f32 0.0, %v2042
  %v2044 = vpop.f32.mrb[0].mxu0
  %2045 = vmatprep.mubr.bf16.mxu0 %v1838
  %2046 = vmatmul.mubr.bf16.gmra.mrb[0].mxu0 %v1837
  %v2047 = vpop.f32.mrb[0].mxu0
  %v2048 = vadd.f32 0.0, %v2047
  %v2049 = vpop.f32.mrb[0].mxu0
  %v2050 = vpop.f32.mrb[0].mxu0
  %v2051 = vadd.f32 0.0, %v2050
  %v2052 = vpop.f32.mrb[0].mxu0
  %2053 = vmatprep.mubr.bf16.mxu0 %v1841
  %2054 = vmatmul.mubr.bf16.gmra.mrb[0].mxu0 %v1840
  %v2055 = vpop.f32.mrb[0].mxu0
  %v2056 = vadd.f32 0.0, %v2055
  %v2057 = vpop.f32.mrb[0].mxu0
  %v2058 = vpop.f32.mrb[0].mxu0
  %v2059 = vadd.f32 0.0, %v2058
  %v2060 = vpop.f32.mrb[0].mxu0
  %2061 = vmatprep.mubr.bf16.mxu0 %v1844
  %2062 = vmatmul.mubr.bf16.gmra.mrb[0].mxu0 %v1843
  %v2063 = vpop.f32.mrb[0].mxu0
  %v2064 = vadd.f32 0.0, %v2063
  %v2065 = vpop.f32.mrb[0].mxu0
  %v2066 = vpop.f32.mrb[0].mxu0
  %v2067 = vadd.f32 0.0, %v2066
  %v2068 = vpop.f32.mrb[0].mxu0
  %2069 = vmatprep.mubr.bf16.mxu0 %v1847
  %2070 = vmatmul.mubr.bf16.gmra.mrb[0].mxu0 %v1846
  %v2071 = vpop.f32.mrb[0].mxu0
  %v2072 = vadd.f32 0.0, %v2071
  %v2073 = vpop.f32.mrb[0].mxu0
  %v2074 = vpop.f32.mrb[0].mxu0
  %v2075 = vadd.f32 0.0, %v2074
  %v2076 = vpop.f32.mrb[0].mxu0
  %2077 = vdwg.mxu0
  %2078 = vmatprep.subr.bf16.mxu0 0
  %2079 = vmatpush1.bf16.msra.mxu0 %v1937
  %2080 = vmatprep.subr.bf16.mxu0 0
  %2081 = vmatpush1.bf16.msra.mxu0 %v1938
  %2082 = vmatprep.subr.bf16.mxu0 0
  %2083 = vmatpush1.bf16.msra.mxu0 0
  %2084 = vmatprep.subr.bf16.mxu0 0
  %2085 = vmatpush1.bf16.msra.mxu0 0
  %2086 = vmatprep.subr.bf16.mxu0 0
  %2087 = vmatpush1.bf16.msra.mxu0 0
  %2088 = vmatprep.subr.bf16.mxu0 0
  %2089 = vmatpush1.bf16.msra.mxu0 0
  %2090 = vmatprep.subr.bf16.mxu0 0
  %2091 = vmatpush1.bf16.msra.mxu0 0
  %2092 = vmatprep.subr.bf16.mxu0 0
  %2093 = vmatpush1.bf16.msra.mxu0 0
  %2094 = vmatprep.subr.bf16.mxu0 0
  %2095 = vmatpush1.bf16.msra.mxu0 0
  %2096 = vmatprep.subr.bf16.mxu0 0
  %2097 = vmatpush1.bf16.msra.mxu0 0
  %2098 = vmatprep.subr.bf16.mxu0 0
  %2099 = vmatpush1.bf16.msra.mxu0 0
  %2100 = vmatprep.subr.bf16.mxu0 0
  %2101 = vmatpush1.bf16.msra.mxu0 0
  %2102 = vmatprep.subr.bf16.mxu0 0
  %2103 = vmatpush1.bf16.msra.mxu0 0
  %2104 = vmatprep.subr.bf16.mxu0 0
  %2105 = vmatpush1.bf16.msra.mxu0 0
  %2106 = vmatprep.subr.bf16.mxu0 0
  %2107 = vmatpush1.bf16.msra.mxu0 0
  %2108 = vmatprep.subr.bf16.mxu0 0
  %2109 = vmatpush1.bf16.msra.mxu0 0
  %2110 = vmatprep.mubr.bf16.mxu0 0
  %2111 = vmatmul.mubr.bf16.gmra.mrb[0].mxu0 %v1958
  %v2112 = vpop.f32.mrb[0].mxu0
  %v2113 = vadd.f32 %v2016, %v2112
  %v2114 = vpop.f32.mrb[0].mxu0
  %v2115 = vpop.f32.mrb[0].mxu0
  %v2116 = vadd.f32 %v2019, %v2115
  %v2117 = vpop.f32.mrb[0].mxu0
  %2118 = vmatprep.mubr.bf16.mxu0 0
  %2119 = vmatmul.mubr.bf16.gmra.mrb[0].mxu0 %v1961
  %v2120 = vpop.f32.mrb[0].mxu0
  %v2121 = vadd.f32 %v2024, %v2120
  %v2122 = vpop.f32.mrb[0].mxu0
  %v2123 = vpop.f32.mrb[0].mxu0
  %v2124 = vadd.f32 %v2027, %v2123
  %v2125 = vpop.f32.mrb[0].mxu0
  %2126 = vmatprep.mubr.bf16.mxu0 0
  %2127 = vmatmul.mubr.bf16.gmra.mrb[0].mxu0 %v1964
  %v2128 = vpop.f32.mrb[0].mxu0
  %v2129 = vadd.f32 %v2032, %v2128
  %v2130 = vpop.f32.mrb[0].mxu0
  %v2131 = vpop.f32.mrb[0].mxu0
  %v2132 = vadd.f32 %v2035, %v2131
  %v2133 = vpop.f32.mrb[0].mxu0
  %2134 = vmatprep.mubr.bf16.mxu0 0
  %2135 = vmatmul.mubr.bf16.gmra.mrb[0].mxu0 %v1967
  %v2136 = vpop.f32.mrb[0].mxu0
  %v2137 = vadd.f32 %v2040, %v2136
  %v2138 = vpop.f32.mrb[0].mxu0
  %v2139 = vpop.f32.mrb[0].mxu0
  %v2140 = vadd.f32 %v2043, %v2139
  %v2141 = vpop.f32.mrb[0].mxu0
  %2142 = vmatprep.mubr.bf16.mxu0 0
  %2143 = vmatmul.mubr.bf16.gmra.mrb[0].mxu0 %v1970
  %v2144 = vpop.f32.mrb[0].mxu0
  %v2145 = vadd.f32 %v2048, %v2144
  %v2146 = vpop.f32.mrb[0].mxu0
  %v2147 = vpop.f32.mrb[0].mxu0
  %v2148 = vadd.f32 %v2051, %v2147
  %v2149 = vpop.f32.mrb[0].mxu0
  %2150 = vmatprep.mubr.bf16.mxu0 0
  %2151 = vmatmul.mubr.bf16.gmra.mrb[0].mxu0 %v1973
  %v2152 = vpop.f32.mrb[0].mxu0
  %v2153 = vadd.f32 %v2056, %v2152
  %v2154 = vpop.f32.mrb[0].mxu0
  %v2155 = vpop.f32.mrb[0].mxu0
  %v2156 = vadd.f32 %v2059, %v2155
  %v2157 = vpop.f32.mrb[0].mxu0
  %2158 = vmatprep.mubr.bf16.mxu0 0
  %2159 = vmatmul.mubr.bf16.gmra.mrb[0].mxu0 %v1976
  %v2160 = vpop.f32.mrb[0].mxu0
  %v2161 = vadd.f32 %v2064, %v2160
  %v2162 = vpop.f32.mrb[0].mxu0
  %v2163 = vpop.f32.mrb[0].mxu0
  %v2164 = vadd.f32 %v2067, %v2163
  %v2165 = vpop.f32.mrb[0].mxu0
  %2166 = vmatprep.mubr.bf16.mxu0 0
  %2167 = vmatmul.mubr.bf16.gmra.mrb[0].mxu0 %v1979
  %v2168 = vpop.f32.mrb[0].mxu0
  %v2169 = vadd.f32 %v2072, %v2168
  %v2170 = vpop.f32.mrb[0].mxu0
  %v2171 = vpop.f32.mrb[0].mxu0
  %v2172 = vadd.f32 %v2075, %v2171
  %v2173 = vpop.f32.mrb[0].mxu0
  %2174 = vdwg.mxu0
  %v2175 = vsel %vm124, %v2113, 0.0
  %v2176 = vsel %vm124, %v2116, 0.0
  %v2177 = vadd.f32 %v2175, %v2176
  %v2178 = vsel %vm124, %v2121, 0.0
  %v2179 = vadd.f32 %v2177, %v2178
  %v2180 = vsel %vm124, %v2124, 0.0
  %v2181 = vadd.f32 %v2179, %v2180
  %v2182 = vsel %vm124, %v2129, 0.0
  %v2183 = vadd.f32 %v2181, %v2182
  %v2184 = vsel %vm124, %v2132, 0.0
  %v2185 = vadd.f32 %v2183, %v2184
  %v2186 = vsel %vm124, %v2137, 0.0
  %v2187 = vadd.f32 %v2185, %v2186
  %v2188 = vsel %vm124, %v2140, 0.0
  %v2189 = vadd.f32 %v2187, %v2188
  %v2190 = vsel %vm124, %v2145, 0.0
  %v2191 = vadd.f32 %v2189, %v2190
  %v2192 = vsel %vm124, %v2148, 0.0
  %v2193 = vadd.f32 %v2191, %v2192
  %v2194 = vsel %vm124, %v2153, 0.0
  %v2195 = vadd.f32 %v2193, %v2194
  %v2196 = vsel %vm124, %v2156, 0.0
  %v2197 = vadd.f32 %v2195, %v2196
  %v2198 = vsel %vm124, %v2161, 0.0
  %v2199 = vadd.f32 %v2197, %v2198
  %v2200 = vsel %vm124, %v2164, 0.0
  %v2201 = vadd.f32 %v2199, %v2200
  %v2202 = vsel %vm124, %v2169, 0.0
  %v2203 = vadd.f32 %v2201, %v2202
  %v2204 = vsel %vm124, %v2172, 0.0
  %v2205 = vadd.f32 %v2203, %v2204
  %v2206 = vrot.slane %v2205, 4
  %v2207 = vadd.f32 %v2205, %v2206
  %v2208 = vrot.slane %v2207, 2
  %v2209 = vadd.f32 %v2207, %v2208
  %v2210 = vrot.slane %v2209, 1
  %v2211 = vadd.f32 %v2209, %v2210
  %v2212 = vmul.f32 %v2211, 0.0078125
  %v2213 = vsub.f32 %v2113, %v2212
  %v2214 = vsub.f32 %v2116, %v2212
  %v2215 = vsub.f32 %v2121, %v2212
  %v2216 = vsub.f32 %v2124, %v2212
  %v2217 = vsub.f32 %v2129, %v2212
  %v2218 = vsub.f32 %v2132, %v2212
  %v2219 = vsub.f32 %v2137, %v2212
  %v2220 = vsub.f32 %v2140, %v2212
  %v2221 = vsub.f32 %v2145, %v2212
  %v2222 = vsub.f32 %v2148, %v2212
  %v2223 = vsub.f32 %v2153, %v2212
  %v2224 = vsub.f32 %v2156, %v2212
  %v2225 = vsub.f32 %v2161, %v2212
  %v2226 = vsub.f32 %v2164, %v2212
  %v2227 = vsub.f32 %v2169, %v2212
  %v2228 = vsub.f32 %v2172, %v2212
  %v2229 = vmul.f32 %v2213, %v2213
  %v2230 = vmul.f32 %v2214, %v2214
  %v2231 = vmul.f32 %v2215, %v2215
  %v2232 = vmul.f32 %v2216, %v2216
  %v2233 = vmul.f32 %v2217, %v2217
  %v2234 = vmul.f32 %v2218, %v2218
  %v2235 = vmul.f32 %v2219, %v2219
  %v2236 = vmul.f32 %v2220, %v2220
  %v2237 = vmul.f32 %v2221, %v2221
  %v2238 = vmul.f32 %v2222, %v2222
  %v2239 = vmul.f32 %v2223, %v2223
  %v2240 = vmul.f32 %v2224, %v2224
  %v2241 = vmul.f32 %v2225, %v2225
  %v2242 = vmul.f32 %v2226, %v2226
  %v2243 = vmul.f32 %v2227, %v2227
  %v2244 = vmul.f32 %v2228, %v2228
  %v2245 = vsel %vm124, %v2229, 0.0
  %v2246 = vsel %vm124, %v2230, 0.0
  %v2247 = vadd.f32 %v2245, %v2246
  %v2248 = vsel %vm124, %v2231, 0.0
  %v2249 = vadd.f32 %v2247, %v2248
  %v2250 = vsel %vm124, %v2232, 0.0
  %v2251 = vadd.f32 %v2249, %v2250
  %v2252 = vsel %vm124, %v2233, 0.0
  %v2253 = vadd.f32 %v2251, %v2252
  %v2254 = vsel %vm124, %v2234, 0.0
  %v2255 = vadd.f32 %v2253, %v2254
  %v2256 = vsel %vm124, %v2235, 0.0
  %v2257 = vadd.f32 %v2255, %v2256
  %v2258 = vsel %vm124, %v2236, 0.0
  %v2259 = vadd.f32 %v2257, %v2258
  %v2260 = vsel %vm124, %v2237, 0.0
  %v2261 = vadd.f32 %v2259, %v2260
  %v2262 = vsel %vm124, %v2238, 0.0
  %v2263 = vadd.f32 %v2261, %v2262
  %v2264 = vsel %vm124, %v2239, 0.0
  %v2265 = vadd.f32 %v2263, %v2264
  %v2266 = vsel %vm124, %v2240, 0.0
  %v2267 = vadd.f32 %v2265, %v2266
  %v2268 = vsel %vm124, %v2241, 0.0
  %v2269 = vadd.f32 %v2267, %v2268
  %v2270 = vsel %vm124, %v2242, 0.0
  %v2271 = vadd.f32 %v2269, %v2270
  %v2272 = vsel %vm124, %v2243, 0.0
  %v2273 = vadd.f32 %v2271, %v2272
  %v2274 = vsel %vm124, %v2244, 0.0
  %v2275 = vadd.f32 %v2273, %v2274
  %v2276 = vrot.slane %v2275, 4
  %v2277 = vadd.f32 %v2275, %v2276
  %v2278 = vrot.slane %v2277, 2
  %v2279 = vadd.f32 %v2277, %v2278
  %v2280 = vrot.slane %v2279, 1
  %v2281 = vadd.f32 %v2279, %v2280
  %v2282 = vmul.f32 %v2281, 0.0078125
  %v2283 = vadd.f32 %v2282, 1e-05
  %v2284 = vrsqrt.pop %v2283
  %v2285 = vmul.f32 %v123, %v2284
  %v2286 = vlaneseq
  %v2287 = vshrl.u32 %v2286, 7
  %v2288 = vsub.s32 2, %v2287
  %v2289 = vrot.slane %v2285, %v2288
  %v2290 = vmul.f32 %v2213, %v2289
  %v2291 = vmul.f32 %v2214, %v2289
  %v2292 = vmul.f32 %v2215, %v2289
  %v2293 = vmul.f32 %v2216, %v2289
  %v2294 = vmul.f32 %v2217, %v2289
  %v2295 = vmul.f32 %v2218, %v2289
  %v2296 = vmul.f32 %v2219, %v2289
  %v2297 = vmul.f32 %v2220, %v2289
  %v2298 = vmul.f32 %v2221, %v2289
  %v2299 = vmul.f32 %v2222, %v2289
  %v2300 = vmul.f32 %v2223, %v2289
  %v2301 = vmul.f32 %v2224, %v2289
  %v2302 = vmul.f32 %v2225, %v2289
  %v2303 = vmul.f32 %v2226, %v2289
  %v2304 = vmul.f32 %v2227, %v2289
  %v2305 = vmul.f32 %v2228, %v2289
  %v2306 = vlaneseq
  %v2307 = vshrl.u32 %v2306, 7
  %v2308 = vsub.s32 3, %v2307
  %v2309 = vrot.slane %v123, %v2308
  %v2310 = vadd.f32 %v2290, %v2309
  %v2311 = vadd.f32 %v2291, %v2309
  %v2312 = vadd.f32 %v2292, %v2309
  %v2313 = vadd.f32 %v2293, %v2309
  %v2314 = vadd.f32 %v2294, %v2309
  %v2315 = vadd.f32 %v2295, %v2309
  %v2316 = vadd.f32 %v2296, %v2309
  %v2317 = vadd.f32 %v2297, %v2309
  %v2318 = vadd.f32 %v2298, %v2309
  %v2319 = vadd.f32 %v2299, %v2309
  %v2320 = vadd.f32 %v2300, %v2309
  %v2321 = vadd.f32 %v2301, %v2309
  %v2322 = vadd.f32 %v2302, %v2309
  %v2323 = vadd.f32 %v2303, %v2309
  %v2324 = vadd.f32 %v2304, %v2309
  %v2325 = vadd.f32 %v2305, %v2309
  %v2326 = vadd.f32 %v2310, %v59
  %v2327 = vadd.f32 %v2311, %v60
  %v2328 = vadd.f32 %v2312, %v61
  %v2329 = vadd.f32 %v2313, %v62
  %v2330 = vadd.f32 %v2314, %v63
  %v2331 = vadd.f32 %v2315, %v64
  %v2332 = vadd.f32 %v2316, %v65
  %v2333 = vadd.f32 %v2317, %v66
  %v2334 = vadd.f32 %v2318, %v67
  %v2335 = vadd.f32 %v2319, %v68
  %v2336 = vadd.f32 %v2320, %v69
  %v2337 = vadd.f32 %v2321, %v70
  %v2338 = vadd.f32 %v2322, %v71
  %v2339 = vadd.f32 %v2323, %v72
  %v2340 = vadd.f32 %v2324, %v73
  %v2341 = vadd.f32 %v2325, %v74
  %v2342 = vmax.f32 %v2326, 0.0
  %v2343 = vmax.f32 %v2327, 0.0
  %v2344 = vmax.f32 %v2328, 0.0
  %v2345 = vmax.f32 %v2329, 0.0
  %v2346 = vmax.f32 %v2330, 0.0
  %v2347 = vmax.f32 %v2331, 0.0
  %v2348 = vmax.f32 %v2332, 0.0
  %v2349 = vmax.f32 %v2333, 0.0
  %v2350 = vmax.f32 %v2334, 0.0
  %v2351 = vmax.f32 %v2335, 0.0
  %v2352 = vmax.f32 %v2336, 0.0
  %v2353 = vmax.f32 %v2337, 0.0
  %v2354 = vmax.f32 %v2338, 0.0
  %v2355 = vmax.f32 %v2339, 0.0
  %v2356 = vmax.f32 %v2340, 0.0
  %v2357 = vmax.f32 %v2341, 0.0
  %2358 = vst.msk [vmem:[%s4] sm:$0xff] %vm124, %v2342
  %2359 = vst.msk [vmem:[%s4 + $0x8] sm:$0xff] %vm124, %v2343
  %2360 = vst.msk [vmem:[%s4 + $0x10] sm:$0xff] %vm124, %v2344
  %2361 = vst.msk [vmem:[%s4 + $0x18] sm:$0xff] %vm124, %v2345
  %2362 = vst.msk [vmem:[%s4 + $0x20] sm:$0xff] %vm124, %v2346
  %2363 = vst.msk [vmem:[%s4 + $0x28] sm:$0xff] %vm124, %v2347
  %2364 = vst.msk [vmem:[%s4 + $0x30] sm:$0xff] %vm124, %v2348
  %2365 = vst.msk [vmem:[%s4 + $0x38] sm:$0xff] %vm124, %v2349
  %2366 = vst.msk [vmem:[%s4 + $0x40] sm:$0xff] %vm124, %v2350
  %2367 = vst.msk [vmem:[%s4 + $0x48] sm:$0xff] %vm124, %v2351
  %2368 = vst.msk [vmem:[%s4 + $0x50] sm:$0xff] %vm124, %v2352
  %2369 = vst.msk [vmem:[%s4 + $0x58] sm:$0xff] %vm124, %v2353
  %2370 = vst.msk [vmem:[%s4 + $0x60] sm:$0xff] %vm124, %v2354
  %2371 = vst.msk [vmem:[%s4 + $0x68] sm:$0xff] %vm124, %v2355
  %2372 = vst.msk [vmem:[%s4 + $0x70] sm:$0xff] %vm124, %v2356
  %2373 = vst.msk [vmem:[%s4 + $0x78] sm:$0xff] %vm124, %v2357
  // Predicated region
  $region22: #{fwd.1} parent=0 // pred_check
    _
  $region23: #{fwd.1} parent=0 // pred_check_branch
    %2375 = sbr.rel (0) target = $region25
  $region24: #{fwd.1} parent=0 // pred_region
    _
  $region25: #{fwd.1} parent=0 // pred_fallthru
    _
  // Predicated region
  $region26: #{fwd.1} parent=0 // pred_check
    _
  $region27: #{fwd.1} parent=0 // pred_check_branch
    %2377 = sbr.rel (0) target = $region29
  $region28: #{fwd.1} parent=0 // pred_region
    _
  $region29: #{fwd.1} parent=0 // pred_fallthru
    _

</llo_original>
